<compile_context>
chip_gen: v5e
topology: v5e:2x2
jax: 0.10.0
libtpu: 0.0.40
codegen_flags: <defaults>
</compile_context>

<pallas_src>
import functools

import jax
import jax.numpy as jnp
from jax.experimental import pallas as pl
from jax.experimental.pallas import tpu as pltpu

LANE = 128  # TPU lane width; feature dims are padded to multiples of this


def _round_up(x, m):
    return (x + m - 1) // m * m


def _pick_tile(n, requested):
    """Largest power-of-two tile <= requested that keeps padding minimal."""
    t = requested
    min_pad = _round_up(n, LANE)
    while t > LANE and _round_up(n, t) > min_pad:
        t //= 2
    return t


# ---------------------------------------------------------------------------
# Fused GraphConv kernel:  O = act( (Â @ X) @ W + b )
#   grid = (row-block i, k-block k); f32 VMEM accumulator over k; the weight
#   matmul / bias / activation run on the accumulator at the last k step.
# ---------------------------------------------------------------------------
def _gconv_kernel(adj_ref, x_ref, w_ref, b_ref, o_ref, acc_ref, *,
                  tk, apply_relu, x_resident):
    k = pl.program_id(1)

    @pl.when(k == 0)
    def _():
        acc_ref[...] = jnp.zeros_like(acc_ref)

    if x_resident:
        # Whole (N, F) feature matrix lives in VMEM; slice the k-chunk locally.
        start = pl.multiple_of(k * tk, tk)
        xk = x_ref[pl.ds(start, tk), :]
    else:
        xk = x_ref[...]

    acc_ref[...] += jnp.dot(adj_ref[...], xk,
                            preferred_element_type=jnp.float32)

    @pl.when(k == pl.num_programs(1) - 1)
    def _():
        # Small (tm,128)@(128,128) f32 matmul; hides under the adj DMA.
        h = jnp.dot(acc_ref[...], w_ref[...],
                    preferred_element_type=jnp.float32)
        h = h + b_ref[...]
        if apply_relu:
            h = jnp.maximum(h, 0.0)
        o_ref[...] = h.astype(o_ref.dtype)


def graph_conv(adj_p, x_p, w, b, *, tm, tk, apply_relu, out_dtype,
               resident_x_budget_bytes=16 << 20):
    np_ = adj_p.shape[0]
    fin = x_p.shape[1]       # aggregated width (padded nfeat / nhid)
    fout = w.shape[1]        # output width (padded nhid / nclass)
    out_itemsize = jnp.dtype(out_dtype).itemsize

    x_bytes = x_p.size * x_p.dtype.itemsize
    x_resident = x_bytes <= resident_x_budget_bytes

    kernel = functools.partial(_gconv_kernel, tk=tk, apply_relu=apply_relu,
                               x_resident=x_resident)

    if x_resident:
        # Constant block index -> DMA'd into VMEM once for the whole grid.
        x_spec = pl.BlockSpec((np_, fin), lambda i, k: (0, 0))
        x_vmem = x_bytes
    else:
        x_spec = pl.BlockSpec((tk, fin), lambda i, k: (k, 0))
        x_vmem = 2 * tk * fin * x_p.dtype.itemsize

    # Plan-aware VMEM budget (v5e default scoped is only 16 MiB; v7x physical
    # VMEM is 64 MiB -> cap at 48 MiB).
    plan_bytes = (2 * tm * tk * adj_p.dtype.itemsize     # double-buffered adj
                  + x_vmem                               # feature matrix
                  + w.size * 4 + 8 * fout * 4            # weights + bias
                  + 2 * tm * fout * out_itemsize         # double-buffered out
                  + tm * fin * 4)                        # f32 accumulator
    vmem_limit = int(min(48 << 20, max(32 << 20, plan_bytes + (8 << 20))))

    return pl.pallas_call(
        kernel,
        out_shape=jax.ShapeDtypeStruct((np_, fout), out_dtype),
        grid_spec=pltpu.PrefetchScalarGridSpec(
            num_scalar_prefetch=0,
            grid=(np_ // tm, np_ // tk),
            in_specs=[
                pl.BlockSpec((tm, tk), lambda i, k: (i, k)),
                x_spec,
                pl.BlockSpec((fin, fout), lambda i, k: (0, 0)),
                pl.BlockSpec((1, fout), lambda i, k: (0, 0)),
            ],
            out_specs=pl.BlockSpec((tm, fout), lambda i, k: (i, 0)),
            scratch_shapes=[pltpu.VMEM((tm, fin), jnp.float32)],
        ),
        compiler_params=pltpu.CompilerParams(
            dimension_semantics=("parallel", "arbitrary"),
            vmem_limit_bytes=vmem_limit),
        cost_estimate=pl.CostEstimate(
            flops=2 * np_ * np_ * fin + 2 * np_ * fin * fout,
            transcendentals=0,
            bytes_accessed=(adj_p.size * adj_p.dtype.itemsize
                            + x_bytes
                            + w.size * 4 + fout * 4
                            + np_ * fout * out_itemsize)),
    )(adj_p, x_p, w, b)


# ---------------------------------------------------------------------------
# Wrapper: fc fold, lane-dense padding (skipped for adj when tile-aligned),
# bf16 MXU feeds, two fused GraphConv calls.
# ---------------------------------------------------------------------------
def gcn_binary_forward(adj, x, w1, b1, w2, b2, wfc, bfc, *,
                       tm=512, tk=512, compute_dtype=jnp.bfloat16):
    n, nfeat = x.shape
    nhid = w1.shape[1]
    nclass = wfc.shape[1]

    # Fold the final nn.Linear into GraphConv-2 (exact, by linearity).
    w2f = (w2 @ wfc).astype(jnp.float32)                 # (nhid, nclass)
    b2f = (b2 @ wfc + bfc).astype(jnp.float32)           # (1, nclass)

    # Tile plan: powers of two, shrunk so node padding stays minimal; with
    # power-of-two tiles, lcm(tm, tk) == max(tm, tk).
    tm = _pick_tile(n, tm)
    tk = _pick_tile(n, tk)
    np_ = _round_up(n, max(tm, tk))
    fp = _round_up(nfeat, LANE)
    hp = _round_up(nhid, LANE)
    cp = _round_up(nclass, LANE)

    cd = compute_dtype
    if np_ == n:
        # No O(N^2) pad copy; cast only if needed (accepts a pre-cast adj).
        adj_p = adj if adj.dtype == cd else adj.astype(cd)
    else:
        adj_p = jnp.zeros((np_, np_), cd).at[:n, :n].set(adj.astype(cd))

    x_p = jnp.zeros((np_, fp), cd).at[:n, :nfeat].set(x.astype(cd))
    w1_p = jnp.zeros((fp, hp), jnp.float32).at[:nfeat, :nhid].set(
        w1.astype(jnp.float32))
    b1_p = jnp.zeros((1, hp), jnp.float32).at[:, :nhid].set(
        b1.astype(jnp.float32).reshape(1, nhid))
    w2f_p = jnp.zeros((hp, cp), jnp.float32).at[:nhid, :nclass].set(w2f)
    b2f_p = jnp.zeros((1, cp), jnp.float32).at[:, :nclass].set(
        b2f.reshape(1, nclass))

    # Layer 1: H1 = relu( (Â X) W1 + b1 )    [fused epilogue]
    h1 = graph_conv(adj_p, x_p, w1_p, b1_p, tm=tm, tk=tk,
                    apply_relu=True, out_dtype=cd)
    # dropout(p) between layers is identity in eval mode.

    # Layer 2 (+ folded fc): out = (Â H1) (W2 Wfc) + (b2 Wfc + bfc)
    out_p = graph_conv(adj_p, h1, w2f_p, b2f_p, tm=tm, tk=tk,
                       apply_relu=False, out_dtype=jnp.float32)

    return out_p[:n, :nclass]


def _normalized_adjacency(key, n):
    # random symmetric graph + self loops, D^-1/2 (A+I) D^-1/2
    raw = jax.random.uniform(key, (n, n))
    a = (raw + raw.T > 1.4).astype(jnp.float32)
    a = jnp.minimum(a + jnp.eye(n, dtype=jnp.float32), 1.0)
    dinv = 1.0 / jnp.sqrt(a.sum(axis=1))
    return a * dinv[:, None] * dinv[None, :]


if __name__ == "__main__":
    # GCN_binary(nfeat, nhid, nclass, dropout) hyperparams; N chosen so the
    # (row-block, k-block) grid is (2, 2) with 512x512 adj tiles and the
    # tile-aligned (no-pad) adjacency path is exercised.
    N, nfeat, nhid, nclass = 1024, 64, 32, 1

    key = jax.random.PRNGKey(0)
    k_adj, k_x, k_w1, k_b1, k_w2, k_b2, k_wfc, k_bfc = jax.random.split(key, 8)

    adj = _normalized_adjacency(k_adj, N)
    x = jax.random.normal(k_x, (N, nfeat), dtype=jnp.float32)

    w1 = jax.random.normal(k_w1, (nfeat, nhid), dtype=jnp.float32) * 0.1
    b1 = jax.random.normal(k_b1, (1, nhid), dtype=jnp.float32) * 0.1
    w2 = jax.random.normal(k_w2, (nhid, nhid), dtype=jnp.float32) * 0.1
    b2 = jax.random.normal(k_b2, (1, nhid), dtype=jnp.float32) * 0.1
    wfc = jax.random.normal(k_wfc, (nhid, nclass), dtype=jnp.float32) * 0.1
    bfc = jax.random.normal(k_bfc, (1, nclass), dtype=jnp.float32) * 0.1

    out = gcn_binary_forward(adj, x, w1, b1, w2, b2, wfc, bfc)
    out = jax.block_until_ready(out)

    # Full-f32 reference of the original module semantics. Tolerance loosened
    # because the kernel feeds the MXU in bf16 (f32 accumulation).
    h1 = jnp.maximum(adj @ (x @ w1) + b1, 0.0)
    h2 = adj @ (h1 @ w2) + b2
    ref = h2 @ wfc + bfc

    assert out.shape == (N, nclass)
    err = float(jnp.max(jnp.abs(out - ref)))
    assert jnp.allclose(out, ref, atol=2e-2, rtol=2e-2), f"max abs err {err}"

    print("KERNEL_OK")
</pallas_src>

<mosaic_0001>
module attributes {stable_mosaic.version = 11 : i64} {
  func.func @_gconv_kernel(%arg0: i32, %arg1: i32, %arg2: memref<512x512xbf16, #tpu.memory_space<vmem>>, %arg3: memref<1024x128xbf16, #tpu.memory_space<vmem>>, %arg4: memref<128x128xf32, #tpu.memory_space<vmem>>, %arg5: memref<1x128xf32, #tpu.memory_space<vmem>>, %arg6: memref<512x128xbf16, #tpu.memory_space<vmem>>, %arg7: memref<512x128xf32, #tpu.memory_space<vmem>>) attributes {dimension_semantics = [#tpu.dimension_semantics<parallel>, #tpu.dimension_semantics<arbitrary>], iteration_bounds = array<i64: 2, 2>, scalar_prefetch = 0 : i64, scratch_operands = 1 : i64, tpu.core_type = #tpu.core_type<tc>, window_params = [{transform_indices = @transform_0, window_bounds = array<i64: 512, 512>}, {pipeline_mode = #tpu.pipeline_mode<synchronous>, transform_indices = @transform_1, window_bounds = array<i64: 1024, 128>}, {pipeline_mode = #tpu.pipeline_mode<synchronous>, transform_indices = @transform_2, window_bounds = array<i64: 128, 128>}, {pipeline_mode = #tpu.pipeline_mode<synchronous>, transform_indices = @transform_3, window_bounds = array<i64: 1, 128>}, {transform_indices = @transform_4, window_bounds = array<i64: 512, 128>}]} {
    %c0_i32 = arith.constant 0 : i32
    %0 = arith.cmpi eq, %arg1, %c0_i32 : i32
    %1 = arith.extui %0 : i1 to i32
    %c0_i32_0 = arith.constant 0 : i32
    %2 = arith.cmpi ne, %1, %c0_i32_0 : i32
    scf.if %2 {
      %cst_8 = arith.constant 0.000000e+00 : f32
      %15 = vector.broadcast %cst_8 : f32 to vector<512x128xf32>
      %c0_9 = arith.constant 0 : index
      %c0_10 = arith.constant 0 : index
      %16 = vector.load %arg7[%c0_9, %c0_10] : memref<512x128xf32, #tpu.memory_space<vmem>>, vector<512x128xf32>
      tpu.vector_store %arg7[%c0_9, %c0_10], %15 {strides = array<i32>} : memref<512x128xf32, #tpu.memory_space<vmem>>, vector<512x128xf32>,
    } else {
    }
    %c512_i32 = arith.constant 512 : i32
    %3 = arith.muli %arg1, %c512_i32 : i32
    %4 = tpu.assume_multiple %3, 512 : i32
    %5 = arith.index_cast %4 : i32 to index
    %c0 = arith.constant 0 : index
    %6 = vector.load %arg3[%5, %c0] : memref<1024x128xbf16, #tpu.memory_space<vmem>>, vector<512x128xbf16>
    %c0_1 = arith.constant 0 : index
    %c0_2 = arith.constant 0 : index
    %7 = vector.load %arg7[%c0_1, %c0_2] : memref<512x128xf32, #tpu.memory_space<vmem>>, vector<512x128xf32>
    %c0_3 = arith.constant 0 : index
    %c0_4 = arith.constant 0 : index
    %8 = vector.load %arg2[%c0_3, %c0_4] : memref<512x512xbf16, #tpu.memory_space<vmem>>, vector<512x512xbf16>
    %cst = arith.constant dense<0.000000e+00> : vector<512x128xf32>
    %9 = tpu.matmul %8, %6, %cst {dimension_numbers = #tpu.dot_dimension_numbers<[1], [0], [0], [1], [0, 0, 1, 1], [], []>} : vector<512x512xbf16>, vector<512x128xbf16>, vector<512x128xf32> -> vector<512x128xf32>
    %10 = arith.addf %7, %9 : vector<512x128xf32>
    %c0_5 = arith.constant 0 : index
    %c0_6 = arith.constant 0 : index
    %11 = vector.load %arg7[%c0_5, %c0_6] : memref<512x128xf32, #tpu.memory_space<vmem>>, vector<512x128xf32>
    tpu.vector_store %arg7[%c0_5, %c0_6], %10 {strides = array<i32>} : memref<512x128xf32, #tpu.memory_space<vmem>>, vector<512x128xf32>,
    %c1_i32 = arith.constant 1 : i32
    %12 = arith.cmpi eq, %arg1, %c1_i32 : i32
    %13 = arith.extui %12 : i1 to i32
    %c0_i32_7 = arith.constant 0 : i32
    %14 = arith.cmpi ne, %13, %c0_i32_7 : i32
    scf.if %14 {
      %c0_8 = arith.constant 0 : index
      %c0_9 = arith.constant 0 : index
      %15 = vector.load %arg7[%c0_8, %c0_9] : memref<512x128xf32, #tpu.memory_space<vmem>>, vector<512x128xf32>
      %c0_10 = arith.constant 0 : index
      %c0_11 = arith.constant 0 : index
      %16 = vector.load %arg4[%c0_10, %c0_11] : memref<128x128xf32, #tpu.memory_space<vmem>>, vector<128x128xf32>
      %cst_12 = arith.constant dense<0.000000e+00> : vector<512x128xf32>
      %17 = tpu.matmul %15, %16, %cst_12 {dimension_numbers = #tpu.dot_dimension_numbers<[1], [0], [0], [1], [0, 0, 1, 1], [], []>} : vector<512x128xf32>, vector<128x128xf32>, vector<512x128xf32> -> vector<512x128xf32>
      %c0_13 = arith.constant 0 : index
      %c0_14 = arith.constant 0 : index
      %18 = vector.load %arg5[%c0_13, %c0_14] : memref<1x128xf32, #tpu.memory_space<vmem>>, vector<1x128xf32>
      %19 = vector.broadcast %18 : vector<1x128xf32> to vector<512x128xf32>
      %20 = arith.addf %17, %19 : vector<512x128xf32>
      %cst_15 = arith.constant 0.000000e+00 : f32
      %21 = vector.broadcast %cst_15 : f32 to vector<512x128xf32>
      %22 = arith.maximumf %20, %21 : vector<512x128xf32>
      %23 = arith.truncf %22 : vector<512x128xf32> to vector<512x128xbf16>
      %c0_16 = arith.constant 0 : index
      %c0_17 = arith.constant 0 : index
      %24 = vector.load %arg6[%c0_16, %c0_17] : memref<512x128xbf16, #tpu.memory_space<vmem>>, vector<512x128xbf16>
      tpu.vector_store %arg6[%c0_16, %c0_17], %23 {strides = array<i32>} : memref<512x128xbf16, #tpu.memory_space<vmem>>, vector<512x128xbf16>,
    } else {
    }
    return
  }
  func.func @transform_0(%arg0: i32, %arg1: i32) -> (i32, i32) {
    %c0_i32 = arith.constant 0 : i32
    return %arg0, %arg1 : i32, i32
  }
  func.func @transform_1(%arg0: i32, %arg1: i32) -> (i32, i32) {
    %c0_i32 = arith.constant 0 : i32
    %c0_i32_0 = arith.constant 0 : i32
    %c0_i32_1 = arith.constant 0 : i32
    return %c0_i32, %c0_i32_0 : i32, i32
  }
  func.func @transform_2(%arg0: i32, %arg1: i32) -> (i32, i32) {
    %c0_i32 = arith.constant 0 : i32
    %c0_i32_0 = arith.constant 0 : i32
    %c0_i32_1 = arith.constant 0 : i32
    return %c0_i32, %c0_i32_0 : i32, i32
  }
  func.func @transform_3(%arg0: i32, %arg1: i32) -> (i32, i32) {
    %c0_i32 = arith.constant 0 : i32
    %c0_i32_0 = arith.constant 0 : i32
    %c0_i32_1 = arith.constant 0 : i32
    return %c0_i32, %c0_i32_0 : i32, i32
  }
  func.func @transform_4(%arg0: i32, %arg1: i32) -> (i32, i32) {
    %c0_i32 = arith.constant 0 : i32
    %c0_i32_0 = arith.constant 0 : i32
    return %arg0, %c0_i32 : i32, i32
  }
}

</mosaic_0001>

<llo_original>
// kernel: tpu_custom_call.1
$region0: #{tpu_custom_call.1}
  #allocation0 [shape = 'u32[]', space=smem, size = 0x4, offset = 0x4, fixed_abs, tag = 'smem constant byte address 0x4 - core index']
  #allocation1 [shape = 'u32[72,128]{1,0:T(1,128)}', space=vmem, size = 0x9000, scoped, tag = 'internal scratch']
  #allocation2 [shape = 'f32[512,128]{1,0:T(8,128)}', space=vmem, size = 0x40000, scoped, tag = 'scratch operand']
  %s0 = inlined_call_operand.hbm [shape: bf16[1024,1024], index: 0, kind: input, shape index: {}]
  %s1 = inlined_call_operand.hbm [shape: bf16[1024,128], index: 1, kind: input, shape index: {}]
  %s2 = inlined_call_operand.hbm [shape: f32[128,128], index: 2, kind: input, shape index: {}]
  %s3 = inlined_call_operand.hbm [shape: f32[1,128], index: 3, kind: input, shape index: {}]
  %s4 = inlined_call_operand.hbm [shape: bf16[1024,128], index: 4, kind: output, shape index: {}]
  %s5 = sld [smem:[#allocation0]]
  $region73: #{tpu_custom_call.1} parent=0
    _
  %s7 = ssub.s32 1, %s5
  %s8 = scalar_select 0, %s7, %s5
  $region1: #{tpu_custom_call.1} parent=0
    #allocation3 [shape = 'u8[1048576]{0}', space=vmem, size = 0x100000, scoped, tag = 'input window, operand 0']
    #allocation4 [shape = 's32[2]{0}', space=sflag, size = 0x8, scoped, tag = 'scoped memory for tpu_custom_call.1']
    #allocation5 [shape = 's32[2]{0}', space=sflag, size = 0x8, scoped, tag = 'scoped memory for tpu_custom_call.1']
    #allocation6 [shape = 'u8[262144]{0}', space=vmem, size = 0x40000, scoped, tag = 'input window, operand 1, single buffered']
    #allocation7 [shape = 's32[1]{0}', space=sflag, size = 0x4, scoped, tag = 'scoped memory for tpu_custom_call.1']
    #allocation8 [shape = 'u8[65536]{0}', space=vmem, size = 0x10000, scoped, tag = 'input window, operand 2, single buffered']
    #allocation9 [shape = 'u8[512]{0}', space=vmem, size = 0x400, scoped, tag = 'input window, operand 3, single buffered']
    #allocation10 [shape = 's32[1]{0}', space=sflag, size = 0x4, scoped, tag = 'scoped memory for tpu_custom_call.1']
    #allocation11 [shape = 'u8[262144]{0}', space=vmem, size = 0x40000, scoped, tag = 'output window, operand 0']
    %9 = vsyncpa [#allocation4], 0
    %s10 = scalar_lea.sflag [#allocation4], 1
    %11 = vsyncpa %s10, 0
    %12 = vsyncpa [#allocation7], 0
    %13 = vsyncpa [#allocation10], 0
    %14 = vsyncpa [#allocation5], 0
    %s15 = scalar_lea.sflag [#allocation5], 1
    %16 = vsyncpa %s15, 0
    loop: start=0, step=1, limit=6
    $region2: #{tpu_custom_call.1} parent=1 // loop_pre_header
      _
    $region3: #{tpu_custom_call.1} parent=1 // loop_header
      %s18 = sphi 0, %s22
      %p19 = scmp.ge.s32.totalorder %s18, 6
      %s25 = sphi 0, %s37
      %s26 = sphi 0, %s33
      %s27 = sphi 0, %s25
      %s28 = sphi 0, %s26
      %s29 = sphi 0, %s27
      %s30 = sphi 0, %s28
      %s42 = sphi 0, %s44
      %s45 = sphi 0, %s42
      %s46 = sphi 0, %s45
      %s62 = sphi 0, %s46
      %s66 = sphi 0, %s66
      %s68 = sphi 0, %s66
      %s69 = sphi 0, %s68
      %s83 = sphi 0, %s69
      %s87 = sphi 0, %s87
      %s89 = sphi 0, %s87
      %s90 = sphi 0, %s89
      %s104 = sphi 0, %s90
      %s108 = sphi 0, %s108
      %s110 = sphi 0, %s108
      %s111 = sphi 0, %s110
      %s125 = sphi 0, %s111
      %s131 = sphi 0, %s133
      %s134 = sphi 0, %s131
      %s135 = sphi 0, %s134
      %s151 = sphi 0, %s135
    $region4: #{tpu_custom_call.1} parent=1 // loop_header_branch
      %21 = sbr.rel (%p19) target = $region8
    $region5: #{tpu_custom_call.1} parent=1 // loop_body
      %s23 = ssub.s32 %s18, 1
      %s24 = ssub.s32 %s18, 2
      %s31 = sadd.s32 1, %s26
      %p32 = scmp.ge.s32.totalorder %s31, 2
      %s33 = scalar_select %p32, 0, %s31
      %s34 = sadd.s32 1, %s25
      %s35 = scalar_select %p32, %s34, %s25
      %p36 = scmp.ge.s32.totalorder %s35, 2
      %s37 = scalar_select %p36, 0, %s35
      %s38 = ssub.s32 %s25, %s37
      %s39 = ssub.s32 %s26, %s33
      %s40 = sor.u32 %s38, %s39
      %p41 = scmp.eq.s32.totalorder %s40, 0
      %s43 = sadd.s32 %s42, 1
      %s44 = scalar_select %p41, %s42, %s43
      %p47 = pneg %p41
      %p48 = scmp.eq.s32.totalorder %s18, 3
      %p49 = por %p47, %p48
      %p50 = scmp.ne.s32.totalorder %s42, %s45
      %p51 = scmp.eq.s32.totalorder %s18, 0
      %p52 = por %p50, %p51
      %p53 = scmp.ne.s32.totalorder %s42, %s45
      %p54 = scmp.eq.s32.totalorder %s23, 3
      %p55 = por %p53, %p54
      %p56 = scmp.ne.s32.totalorder %s45, %s46
      %p57 = scmp.eq.s32.totalorder %s23, 0
      %p58 = por %p56, %p57
      %p59 = scmp.ne.s32.totalorder %s45, %s46
      %p60 = scmp.eq.s32.totalorder %s24, 3
      %p61 = por %p59, %p60
      %p63 = scmp.ne.s32.totalorder %s46, %s62
      %p64 = scmp.eq.s32.totalorder %s24, 0
      %p65 = por %p63, %p64
      %s67 = sadd.s32 %s66, 1
      %p70 = scmp.eq.s32.totalorder %s18, 3
      %p71 = scmp.ne.s32.totalorder %s66, %s68
      %p72 = scmp.eq.s32.totalorder %s18, 0
      %p73 = por %p71, %p72
      %p74 = scmp.ne.s32.totalorder %s66, %s68
      %p75 = scmp.eq.s32.totalorder %s23, 3
      %p76 = por %p74, %p75
      %p77 = scmp.ne.s32.totalorder %s68, %s69
      %p78 = scmp.eq.s32.totalorder %s23, 0
      %p79 = por %p77, %p78
      %p80 = scmp.ne.s32.totalorder %s68, %s69
      %p81 = scmp.eq.s32.totalorder %s24, 3
      %p82 = por %p80, %p81
      %p84 = scmp.ne.s32.totalorder %s69, %s83
      %p85 = scmp.eq.s32.totalorder %s24, 0
      %p86 = por %p84, %p85
      %s88 = sadd.s32 %s87, 1
      %p91 = scmp.eq.s32.totalorder %s18, 3
      %p92 = scmp.ne.s32.totalorder %s87, %s89
      %p93 = scmp.eq.s32.totalorder %s18, 0
      %p94 = por %p92, %p93
      %p95 = scmp.ne.s32.totalorder %s87, %s89
      %p96 = scmp.eq.s32.totalorder %s23, 3
      %p97 = por %p95, %p96
      %p98 = scmp.ne.s32.totalorder %s89, %s90
      %p99 = scmp.eq.s32.totalorder %s23, 0
      %p100 = por %p98, %p99
      %p101 = scmp.ne.s32.totalorder %s89, %s90
      %p102 = scmp.eq.s32.totalorder %s24, 3
      %p103 = por %p101, %p102
      %p105 = scmp.ne.s32.totalorder %s90, %s104
      %p106 = scmp.eq.s32.totalorder %s24, 0
      %p107 = por %p105, %p106
      %s109 = sadd.s32 %s108, 1
      %p112 = scmp.eq.s32.totalorder %s18, 3
      %p113 = scmp.ne.s32.totalorder %s108, %s110
      %p114 = scmp.eq.s32.totalorder %s18, 0
      %p115 = por %p113, %p114
      %p116 = scmp.ne.s32.totalorder %s108, %s110
      %p117 = scmp.eq.s32.totalorder %s23, 3
      %p118 = por %p116, %p117
      %p119 = scmp.ne.s32.totalorder %s110, %s111
      %p120 = scmp.eq.s32.totalorder %s23, 0
      %p121 = por %p119, %p120
      %p122 = scmp.ne.s32.totalorder %s110, %s111
      %p123 = scmp.eq.s32.totalorder %s24, 3
      %p124 = por %p122, %p123
      %p126 = scmp.ne.s32.totalorder %s111, %s125
      %p127 = scmp.eq.s32.totalorder %s24, 0
      %p128 = por %p126, %p127
      %s129 = ssub.s32 %s25, %s37
      %p130 = scmp.eq.s32.totalorder %s129, 0
      %s132 = sadd.s32 %s131, 1
      %s133 = scalar_select %p130, %s131, %s132
      %p136 = pneg %p130
      %p137 = scmp.eq.s32.totalorder %s18, 3
      %p138 = por %p136, %p137
      %p139 = scmp.ne.s32.totalorder %s131, %s134
      %p140 = scmp.eq.s32.totalorder %s18, 0
      %p141 = por %p139, %p140
      %p142 = scmp.ne.s32.totalorder %s131, %s134
      %p143 = scmp.eq.s32.totalorder %s23, 3
      %p144 = por %p142, %p143
      %p145 = scmp.ne.s32.totalorder %s134, %s135
      %p146 = scmp.eq.s32.totalorder %s23, 0
      %p147 = por %p145, %p146
      %p148 = scmp.ne.s32.totalorder %s134, %s135
      %p149 = scmp.eq.s32.totalorder %s24, 3
      %p150 = por %p148, %p149
      %p152 = scmp.ne.s32.totalorder %s135, %s151
      %p153 = scmp.eq.s32.totalorder %s24, 0
      %p154 = por %p152, %p153
      %p155 = scmp.le.s32.totalorder 1, %s18
      %p156 = scmp.lt.s32.totalorder %s18, 5
      %p157 = pnand %p155, %p156
      %p158 = pneg %p157
      // Predicated region
      $region9: #{tpu_custom_call.1} parent=5 // pred_check
        _
      $region10: #{tpu_custom_call.1} parent=5 // pred_check_branch
        %160 = sbr.rel (%p157) target = $region12
      $region11: #{tpu_custom_call.1} parent=5 // pred_region
        %s161 = ssub.s32 %s18, 1
        // Predicated region
        $region13: #{tpu_custom_call.1} parent=11 // pred_check
          %p162 = pneg %p79
        $region14: #{tpu_custom_call.1} parent=11 // pred_check_branch
          %164 = sbr.rel (%p162) target = $region16
        $region15: #{tpu_custom_call.1} parent=11 // pred_region
          %166 = vsyncadd [#allocation7], 0
          %s167 = sshll.u32 %s1, 4
          %s168 = int_to_ptr.hbm [resolvable:$true] %s167
          %s169 = sshll.u32 [#allocation6], 4
          %s170 = int_to_ptr.vmem [resolvable:$true] %s169
          %175 = dma.hbm_to_vmem [thread:$0]  %s168, 8192, %s170, [#allocation7], 64, 64, 4
        $region16: #{tpu_custom_call.1} parent=11 // pred_fallthru
          _
        // Predicated region
        $region17: #{tpu_custom_call.1} parent=11 // pred_check
          %p176 = pneg %p100
        $region18: #{tpu_custom_call.1} parent=11 // pred_check_branch
          %178 = sbr.rel (%p176) target = $region20
        $region19: #{tpu_custom_call.1} parent=11 // pred_region
          %180 = vsyncadd [#allocation7], 0
          %s181 = sshll.u32 %s2, 4
          %s182 = int_to_ptr.hbm [resolvable:$true] %s181
          %s183 = sshll.u32 [#allocation8], 4
          %s184 = int_to_ptr.vmem [resolvable:$true] %s183
          %189 = dma.hbm_to_vmem [thread:$0]  %s182, 2048, %s184, [#allocation7], 128, 128, 8
        $region20: #{tpu_custom_call.1} parent=11 // pred_fallthru
          _
        // Predicated region
        $region21: #{tpu_custom_call.1} parent=11 // pred_check
          %p190 = pneg %p121
        $region22: #{tpu_custom_call.1} parent=11 // pred_check_branch
          %192 = sbr.rel (%p190) target = $region24
        $region23: #{tpu_custom_call.1} parent=11 // pred_region
          %194 = vsyncadd [#allocation10], 0
          %s196 = sshll.u32 %s3, 4
          %s197 = int_to_ptr.hbm [resolvable:$true] %s196
          %s198 = sshll.u32 [#allocation9], 4
          %s199 = int_to_ptr.vmem [resolvable:$true] %s198
          %201 = dma.hbm_to_vmem [thread:$0]  %s197, 16, %s199, [#allocation10]
        $region24: #{tpu_custom_call.1} parent=11 // pred_fallthru
          _
      $region12: #{tpu_custom_call.1} parent=5 // pred_fallthru
        _
      %p202 = scmp.lt.s32.totalorder %s18, 4
      // Predicated region
      $region25: #{tpu_custom_call.1} parent=5 // pred_check
        %p203 = pneg %p202
      $region26: #{tpu_custom_call.1} parent=5 // pred_check_branch
        %205 = sbr.rel (%p203) target = $region28
      $region27: #{tpu_custom_call.1} parent=5 // pred_region
        // Predicated region
        $region29: #{tpu_custom_call.1} parent=27 // pred_check
          %p206 = pneg %p52
        $region30: #{tpu_custom_call.1} parent=27 // pred_check_branch
          %208 = sbr.rel (%p206) target = $region32
        $region31: #{tpu_custom_call.1} parent=27 // pred_region
          %s209 = sand.u32 %s42, 1
          %s210 = scalar_lea.sflag [#allocation4], %s209
          %s211 = sand.u32 %s42, 1
          %s212 = smul.addr %s211, 1024
          %s213 = scalar_lea.vmem [#allocation3], %s212
          %s214 = smul.u32 64, %s25
          %s215 = smul.u32 4, %s26
          %217 = vsyncadd %s210, 0
          %s218 = smul.addr %s214, 8
          %s219 = sadd.s32 %s215, %s218
          %s220 = smul.addr %s219, 4
          %s221 = scalar_lea.hbm %s0, %s220
          %s222 = sshll.u32 %s221, 4
          %s223 = int_to_ptr.hbm [resolvable:$true] %s222
          %s224 = sshll.u32 %s213, 4
          %s225 = int_to_ptr.vmem [resolvable:$true] %s224
          %230 = dma.hbm_to_vmem [thread:$0]  %s223, 16384, %s225, %s210, 512, 256, 16
        $region32: #{tpu_custom_call.1} parent=27 // pred_fallthru
          _
      $region28: #{tpu_custom_call.1} parent=5 // pred_fallthru
        _
      %p231 = scmp.le.s32.totalorder 1, %s18
      %p232 = scmp.lt.s32.totalorder %s18, 5
      %p233 = pnand %p231, %p232
      %p234 = pneg %p233
      // Predicated region
      $region33: #{tpu_custom_call.1} parent=5 // pred_check
        _
      $region34: #{tpu_custom_call.1} parent=5 // pred_check_branch
        %236 = sbr.rel (%p233) target = $region36
      $region35: #{tpu_custom_call.1} parent=5 // pred_region
        %s237 = ssub.s32 %s18, 1
        %s238 = sand.u32 %s45, 1
        %s239 = scalar_lea.sflag [#allocation4], %s238
        %s240 = sand.u32 %s45, 1
        %s241 = smul.addr %s240, 1024
        %s242 = scalar_lea.vmem [#allocation3], %s241
        // Predicated region
        $region37: #{tpu_custom_call.1} parent=35 // pred_check
          %p243 = pneg %p58
        $region38: #{tpu_custom_call.1} parent=35 // pred_check_branch
          %245 = sbr.rel (%p243) target = $region40
        $region39: #{tpu_custom_call.1} parent=35 // pred_region
          %247 = dma.done %s239, 16384
        $region40: #{tpu_custom_call.1} parent=35 // pred_fallthru
          _
        // Predicated region
        $region41: #{tpu_custom_call.1} parent=35 // pred_check
          %p248 = pneg %p79
        $region42: #{tpu_custom_call.1} parent=35 // pred_check_branch
          %250 = sbr.rel (%p248) target = $region44
        $region43: #{tpu_custom_call.1} parent=35 // pred_region
          %252 = dma.done [#allocation7], 8192
        $region44: #{tpu_custom_call.1} parent=35 // pred_fallthru
          _
        // Predicated region
        $region45: #{tpu_custom_call.1} parent=35 // pred_check
          %p253 = pneg %p100
        $region46: #{tpu_custom_call.1} parent=35 // pred_check_branch
          %255 = sbr.rel (%p253) target = $region48
        $region47: #{tpu_custom_call.1} parent=35 // pred_region
          %257 = dma.done [#allocation7], 2048
        $region48: #{tpu_custom_call.1} parent=35 // pred_fallthru
          _
        // Predicated region
        $region49: #{tpu_custom_call.1} parent=35 // pred_check
          %p258 = pneg %p121
        $region50: #{tpu_custom_call.1} parent=35 // pred_check_branch
          %260 = sbr.rel (%p258) target = $region52
        $region51: #{tpu_custom_call.1} parent=35 // pred_region
          %262 = dma.done [#allocation10], 16
        $region52: #{tpu_custom_call.1} parent=35 // pred_fallthru
          _
        %s263 = sand.u32 %s45, 1
        %s264 = scalar_lea.sflag [#allocation4], %s263
        %s265 = sand.u32 %s45, 1
        %s266 = smul.addr %s265, 1024
        %s267 = scalar_lea.vmem [#allocation3], %s266
        %p268 = pneg %p58
        %p269 = pneg %p55
        %p270 = pneg %p79
        %p271 = pneg %p76
        %p272 = pneg %p100
        %p273 = pneg %p97
        %p274 = pneg %p121
        %p275 = pneg %p118
        %p276 = pneg %p147
        %p277 = pneg %p144
        %s278 = sand.u32 %s134, 1
        %s279 = scalar_lea.sflag [#allocation5], %s278
        %s280 = sand.u32 %s134, 1
        %s281 = smul.addr %s280, 256
        %s282 = scalar_lea.vmem [#allocation11], %s281
        %s283 = smul.u32 64, %s27
        %s284 = smul.u32 4, %s28
        %s285 = smul.u32 64, %s27
        %p286 = scmp.eq.s32.totalorder %s28, 0
        // Predicated region
        $region53: #{tpu_custom_call.1} parent=35 // pred_check
          %p287 = pneg %p286
        $region54: #{tpu_custom_call.1} parent=35 // pred_check_branch
          %289 = sbr.rel (%p287) target = $region56
        $region55: #{tpu_custom_call.1} parent=35 // pred_region
          %290 = vst [vmem:[#allocation2] sm:$0xff] 0.0
          %291 = vst [vmem:[#allocation2 + $0x8] sm:$0xff] 0.0
          %292 = vst [vmem:[#allocation2 + $0x10] sm:$0xff] 0.0
          %293 = vst [vmem:[#allocation2 + $0x18] sm:$0xff] 0.0
          %294 = vst [vmem:[#allocation2 + $0x20] sm:$0xff] 0.0
          %295 = vst [vmem:[#allocation2 + $0x28] sm:$0xff] 0.0
          %296 = vst [vmem:[#allocation2 + $0x30] sm:$0xff] 0.0
          %297 = vst [vmem:[#allocation2 + $0x38] sm:$0xff] 0.0
          %298 = vst [vmem:[#allocation2 + $0x40] sm:$0xff] 0.0
          %299 = vst [vmem:[#allocation2 + $0x48] sm:$0xff] 0.0
          %300 = vst [vmem:[#allocation2 + $0x50] sm:$0xff] 0.0
          %301 = vst [vmem:[#allocation2 + $0x58] sm:$0xff] 0.0
          %302 = vst [vmem:[#allocation2 + $0x60] sm:$0xff] 0.0
          %303 = vst [vmem:[#allocation2 + $0x68] sm:$0xff] 0.0
          %304 = vst [vmem:[#allocation2 + $0x70] sm:$0xff] 0.0
          %305 = vst [vmem:[#allocation2 + $0x78] sm:$0xff] 0.0
          %306 = vst [vmem:[#allocation2 + $0x80] sm:$0xff] 0.0
          %307 = vst [vmem:[#allocation2 + $0x88] sm:$0xff] 0.0
          %308 = vst [vmem:[#allocation2 + $0x90] sm:$0xff] 0.0
          %309 = vst [vmem:[#allocation2 + $0x98] sm:$0xff] 0.0
          %310 = vst [vmem:[#allocation2 + $0xa0] sm:$0xff] 0.0
          %311 = vst [vmem:[#allocation2 + $0xa8] sm:$0xff] 0.0
          %312 = vst [vmem:[#allocation2 + $0xb0] sm:$0xff] 0.0
          %313 = vst [vmem:[#allocation2 + $0xb8] sm:$0xff] 0.0
          %314 = vst [vmem:[#allocation2 + $0xc0] sm:$0xff] 0.0
          %315 = vst [vmem:[#allocation2 + $0xc8] sm:$0xff] 0.0
          %316 = vst [vmem:[#allocation2 + $0xd0] sm:$0xff] 0.0
          %317 = vst [vmem:[#allocation2 + $0xd8] sm:$0xff] 0.0
          %318 = vst [vmem:[#allocation2 + $0xe0] sm:$0xff] 0.0
          %319 = vst [vmem:[#allocation2 + $0xe8] sm:$0xff] 0.0
          %320 = vst [vmem:[#allocation2 + $0xf0] sm:$0xff] 0.0
          %321 = vst [vmem:[#allocation2 + $0xf8] sm:$0xff] 0.0
          %322 = vst [vmem:[#allocation2 + $0x100] sm:$0xff] 0.0
          %323 = vst [vmem:[#allocation2 + $0x108] sm:$0xff] 0.0
          %324 = vst [vmem:[#allocation2 + $0x110] sm:$0xff] 0.0
          %325 = vst [vmem:[#allocation2 + $0x118] sm:$0xff] 0.0
          %326 = vst [vmem:[#allocation2 + $0x120] sm:$0xff] 0.0
          %327 = vst [vmem:[#allocation2 + $0x128] sm:$0xff] 0.0
          %328 = vst [vmem:[#allocation2 + $0x130] sm:$0xff] 0.0
          %329 = vst [vmem:[#allocation2 + $0x138] sm:$0xff] 0.0
          %330 = vst [vmem:[#allocation2 + $0x140] sm:$0xff] 0.0
          %331 = vst [vmem:[#allocation2 + $0x148] sm:$0xff] 0.0
          %332 = vst [vmem:[#allocation2 + $0x150] sm:$0xff] 0.0
          %333 = vst [vmem:[#allocation2 + $0x158] sm:$0xff] 0.0
          %334 = vst [vmem:[#allocation2 + $0x160] sm:$0xff] 0.0
          %335 = vst [vmem:[#allocation2 + $0x168] sm:$0xff] 0.0
          %336 = vst [vmem:[#allocation2 + $0x170] sm:$0xff] 0.0
          %337 = vst [vmem:[#allocation2 + $0x178] sm:$0xff] 0.0
          %338 = vst [vmem:[#allocation2 + $0x180] sm:$0xff] 0.0
          %339 = vst [vmem:[#allocation2 + $0x188] sm:$0xff] 0.0
          %340 = vst [vmem:[#allocation2 + $0x190] sm:$0xff] 0.0
          %341 = vst [vmem:[#allocation2 + $0x198] sm:$0xff] 0.0
          %342 = vst [vmem:[#allocation2 + $0x1a0] sm:$0xff] 0.0
          %343 = vst [vmem:[#allocation2 + $0x1a8] sm:$0xff] 0.0
          %344 = vst [vmem:[#allocation2 + $0x1b0] sm:$0xff] 0.0
          %345 = vst [vmem:[#allocation2 + $0x1b8] sm:$0xff] 0.0
          %346 = vst [vmem:[#allocation2 + $0x1c0] sm:$0xff] 0.0
          %347 = vst [vmem:[#allocation2 + $0x1c8] sm:$0xff] 0.0
          %348 = vst [vmem:[#allocation2 + $0x1d0] sm:$0xff] 0.0
          %349 = vst [vmem:[#allocation2 + $0x1d8] sm:$0xff] 0.0
          %350 = vst [vmem:[#allocation2 + $0x1e0] sm:$0xff] 0.0
          %351 = vst [vmem:[#allocation2 + $0x1e8] sm:$0xff] 0.0
          %352 = vst [vmem:[#allocation2 + $0x1f0] sm:$0xff] 0.0
          %353 = vst [vmem:[#allocation2 + $0x1f8] sm:$0xff] 0.0
        $region56: #{tpu_custom_call.1} parent=35 // pred_fallthru
          _
        %s354 = smul.u32 %s28, 512
        %s355 = sshra.s32 %s354, 3
        %s356 = sand.u32 %s354, 7
        %s357 = smul.addr %s355, 4
        %s358 = scalar_lea.vmem [#allocation6], %s357
        %v359 = vld [vmem:[%s358] sm:$0xf]
        %v360 = vld [vmem:[%s358 + $0x4] sm:$0xf]
        %v361 = vld [vmem:[%s358 + $0x8] sm:$0xf]
        %v362 = vld [vmem:[%s358 + $0xc] sm:$0xf]
        %v363 = vld [vmem:[%s358 + $0x10] sm:$0xf]
        %v364 = vld [vmem:[%s358 + $0x14] sm:$0xf]
        %v365 = vld [vmem:[%s358 + $0x18] sm:$0xf]
        %v366 = vld [vmem:[%s358 + $0x1c] sm:$0xf]
        %v367 = vld [vmem:[%s358 + $0x20] sm:$0xf]
        %v368 = vld [vmem:[%s358 + $0x24] sm:$0xf]
        %v369 = vld [vmem:[%s358 + $0x28] sm:$0xf]
        %v370 = vld [vmem:[%s358 + $0x2c] sm:$0xf]
        %v371 = vld [vmem:[%s358 + $0x30] sm:$0xf]
        %v372 = vld [vmem:[%s358 + $0x34] sm:$0xf]
        %v373 = vld [vmem:[%s358 + $0x38] sm:$0xf]
        %v374 = vld [vmem:[%s358 + $0x3c] sm:$0xf]
        %v375 = vld [vmem:[%s358 + $0x40] sm:$0xf]
        %v376 = vld [vmem:[%s358 + $0x44] sm:$0xf]
        %v377 = vld [vmem:[%s358 + $0x48] sm:$0xf]
        %v378 = vld [vmem:[%s358 + $0x4c] sm:$0xf]
        %v379 = vld [vmem:[%s358 + $0x50] sm:$0xf]
        %v380 = vld [vmem:[%s358 + $0x54] sm:$0xf]
        %v381 = vld [vmem:[%s358 + $0x58] sm:$0xf]
        %v382 = vld [vmem:[%s358 + $0x5c] sm:$0xf]
        %v383 = vld [vmem:[%s358 + $0x60] sm:$0xf]
        %v384 = vld [vmem:[%s358 + $0x64] sm:$0xf]
        %v385 = vld [vmem:[%s358 + $0x68] sm:$0xf]
        %v386 = vld [vmem:[%s358 + $0x6c] sm:$0xf]
        %v387 = vld [vmem:[%s358 + $0x70] sm:$0xf]
        %v388 = vld [vmem:[%s358 + $0x74] sm:$0xf]
        %v389 = vld [vmem:[%s358 + $0x78] sm:$0xf]
        %v390 = vld [vmem:[%s358 + $0x7c] sm:$0xf]
        %v391 = vld [vmem:[%s358 + $0x80] sm:$0xf]
        %v392 = vld [vmem:[%s358 + $0x84] sm:$0xf]
        %v393 = vld [vmem:[%s358 + $0x88] sm:$0xf]
        %v394 = vld [vmem:[%s358 + $0x8c] sm:$0xf]
        %v395 = vld [vmem:[%s358 + $0x90] sm:$0xf]
        %v396 = vld [vmem:[%s358 + $0x94] sm:$0xf]
        %v397 = vld [vmem:[%s358 + $0x98] sm:$0xf]
        %v398 = vld [vmem:[%s358 + $0x9c] sm:$0xf]
        %v399 = vld [vmem:[%s358 + $0xa0] sm:$0xf]
        %v400 = vld [vmem:[%s358 + $0xa4] sm:$0xf]
        %v401 = vld [vmem:[%s358 + $0xa8] sm:$0xf]
        %v402 = vld [vmem:[%s358 + $0xac] sm:$0xf]
        %v403 = vld [vmem:[%s358 + $0xb0] sm:$0xf]
        %v404 = vld [vmem:[%s358 + $0xb4] sm:$0xf]
        %v405 = vld [vmem:[%s358 + $0xb8] sm:$0xf]
        %v406 = vld [vmem:[%s358 + $0xbc] sm:$0xf]
        %v407 = vld [vmem:[%s358 + $0xc0] sm:$0xf]
        %v408 = vld [vmem:[%s358 + $0xc4] sm:$0xf]
        %v409 = vld [vmem:[%s358 + $0xc8] sm:$0xf]
        %v410 = vld [vmem:[%s358 + $0xcc] sm:$0xf]
        %v411 = vld [vmem:[%s358 + $0xd0] sm:$0xf]
        %v412 = vld [vmem:[%s358 + $0xd4] sm:$0xf]
        %v413 = vld [vmem:[%s358 + $0xd8] sm:$0xf]
        %v414 = vld [vmem:[%s358 + $0xdc] sm:$0xf]
        %v415 = vld [vmem:[%s358 + $0xe0] sm:$0xf]
        %v416 = vld [vmem:[%s358 + $0xe4] sm:$0xf]
        %v417 = vld [vmem:[%s358 + $0xe8] sm:$0xf]
        %v418 = vld [vmem:[%s358 + $0xec] sm:$0xf]
        %v419 = vld [vmem:[%s358 + $0xf0] sm:$0xf]
        %v420 = vld [vmem:[%s358 + $0xf4] sm:$0xf]
        %v421 = vld [vmem:[%s358 + $0xf8] sm:$0xf]
        %v422 = vld [vmem:[%s358 + $0xfc] sm:$0xf]
        %v423 = vld [vmem:[#allocation2] sm:$0xff]
        %v424 = vld [vmem:[#allocation2 + $0x8] sm:$0xff]
        %v425 = vld [vmem:[#allocation2 + $0x10] sm:$0xff]
        %v426 = vld [vmem:[#allocation2 + $0x18] sm:$0xff]
        %v427 = vld [vmem:[#allocation2 + $0x20] sm:$0xff]
        %v428 = vld [vmem:[#allocation2 + $0x28] sm:$0xff]
        %v429 = vld [vmem:[#allocation2 + $0x30] sm:$0xff]
        %v430 = vld [vmem:[#allocation2 + $0x38] sm:$0xff]
        %v431 = vld [vmem:[#allocation2 + $0x40] sm:$0xff]
        %v432 = vld [vmem:[#allocation2 + $0x48] sm:$0xff]
        %v433 = vld [vmem:[#allocation2 + $0x50] sm:$0xff]
        %v434 = vld [vmem:[#allocation2 + $0x58] sm:$0xff]
        %v435 = vld [vmem:[#allocation2 + $0x60] sm:$0xff]
        %v436 = vld [vmem:[#allocation2 + $0x68] sm:$0xff]
        %v437 = vld [vmem:[#allocation2 + $0x70] sm:$0xff]
        %v438 = vld [vmem:[#allocation2 + $0x78] sm:$0xff]
        %v439 = vld [vmem:[#allocation2 + $0x80] sm:$0xff]
        %v440 = vld [vmem:[#allocation2 + $0x88] sm:$0xff]
        %v441 = vld [vmem:[#allocation2 + $0x90] sm:$0xff]
        %v442 = vld [vmem:[#allocation2 + $0x98] sm:$0xff]
        %v443 = vld [vmem:[#allocation2 + $0xa0] sm:$0xff]
        %v444 = vld [vmem:[#allocation2 + $0xa8] sm:$0xff]
        %v445 = vld [vmem:[#allocation2 + $0xb0] sm:$0xff]
        %v446 = vld [vmem:[#allocation2 + $0xb8] sm:$0xff]
        %v447 = vld [vmem:[#allocation2 + $0xc0] sm:$0xff]
        %v448 = vld [vmem:[#allocation2 + $0xc8] sm:$0xff]
        %v449 = vld [vmem:[#allocation2 + $0xd0] sm:$0xff]
        %v450 = vld [vmem:[#allocation2 + $0xd8] sm:$0xff]
        %v451 = vld [vmem:[#allocation2 + $0xe0] sm:$0xff]
        %v452 = vld [vmem:[#allocation2 + $0xe8] sm:$0xff]
        %v453 = vld [vmem:[#allocation2 + $0xf0] sm:$0xff]
        %v454 = vld [vmem:[#allocation2 + $0xf8] sm:$0xff]
        %v455 = vld [vmem:[#allocation2 + $0x100] sm:$0xff]
        %v456 = vld [vmem:[#allocation2 + $0x108] sm:$0xff]
        %v457 = vld [vmem:[#allocation2 + $0x110] sm:$0xff]
        %v458 = vld [vmem:[#allocation2 + $0x118] sm:$0xff]
        %v459 = vld [vmem:[#allocation2 + $0x120] sm:$0xff]
        %v460 = vld [vmem:[#allocation2 + $0x128] sm:$0xff]
        %v461 = vld [vmem:[#allocation2 + $0x130] sm:$0xff]
        %v462 = vld [vmem:[#allocation2 + $0x138] sm:$0xff]
        %v463 = vld [vmem:[#allocation2 + $0x140] sm:$0xff]
        %v464 = vld [vmem:[#allocation2 + $0x148] sm:$0xff]
        %v465 = vld [vmem:[#allocation2 + $0x150] sm:$0xff]
        %v466 = vld [vmem:[#allocation2 + $0x158] sm:$0xff]
        %v467 = vld [vmem:[#allocation2 + $0x160] sm:$0xff]
        %v468 = vld [vmem:[#allocation2 + $0x168] sm:$0xff]
        %v469 = vld [vmem:[#allocation2 + $0x170] sm:$0xff]
        %v470 = vld [vmem:[#allocation2 + $0x178] sm:$0xff]
        %v471 = vld [vmem:[#allocation2 + $0x180] sm:$0xff]
        %v472 = vld [vmem:[#allocation2 + $0x188] sm:$0xff]
        %v473 = vld [vmem:[#allocation2 + $0x190] sm:$0xff]
        %v474 = vld [vmem:[#allocation2 + $0x198] sm:$0xff]
        %v475 = vld [vmem:[#allocation2 + $0x1a0] sm:$0xff]
        %v476 = vld [vmem:[#allocation2 + $0x1a8] sm:$0xff]
        %v477 = vld [vmem:[#allocation2 + $0x1b0] sm:$0xff]
        %v478 = vld [vmem:[#allocation2 + $0x1b8] sm:$0xff]
        %v479 = vld [vmem:[#allocation2 + $0x1c0] sm:$0xff]
        %v480 = vld [vmem:[#allocation2 + $0x1c8] sm:$0xff]
        %v481 = vld [vmem:[#allocation2 + $0x1d0] sm:$0xff]
        %v482 = vld [vmem:[#allocation2 + $0x1d8] sm:$0xff]
        %v483 = vld [vmem:[#allocation2 + $0x1e0] sm:$0xff]
        %v484 = vld [vmem:[#allocation2 + $0x1e8] sm:$0xff]
        %v485 = vld [vmem:[#allocation2 + $0x1f0] sm:$0xff]
        %v486 = vld [vmem:[#allocation2 + $0x1f8] sm:$0xff]
        %v487 = vld [vmem:[%s242] sm:$0xff]
        %v488 = vld [vmem:[%s242 + $0x8] sm:$0xff]
        %v489 = vld [vmem:[%s242 + $0x10] sm:$0xff]
        %v490 = vld [vmem:[%s242 + $0x18] sm:$0xff]
        %v491 = vld [vmem:[%s242 + $0x20] sm:$0xff]
        %v492 = vld [vmem:[%s242 + $0x28] sm:$0xff]
        %v493 = vld [vmem:[%s242 + $0x30] sm:$0xff]
        %v494 = vld [vmem:[%s242 + $0x38] sm:$0xff]
        %v495 = vld [vmem:[%s242 + $0x40] sm:$0xff]
        %v496 = vld [vmem:[%s242 + $0x48] sm:$0xff]
        %v497 = vld [vmem:[%s242 + $0x50] sm:$0xff]
        %v498 = vld [vmem:[%s242 + $0x58] sm:$0xff]
        %v499 = vld [vmem:[%s242 + $0x60] sm:$0xff]
        %v500 = vld [vmem:[%s242 + $0x68] sm:$0xff]
        %v501 = vld [vmem:[%s242 + $0x70] sm:$0xff]
        %v502 = vld [vmem:[%s242 + $0x78] sm:$0xff]
        %v503 = vld [vmem:[%s242 + $0x80] sm:$0xff]
        %v504 = vld [vmem:[%s242 + $0x88] sm:$0xff]
        %v505 = vld [vmem:[%s242 + $0x90] sm:$0xff]
        %v506 = vld [vmem:[%s242 + $0x98] sm:$0xff]
        %v507 = vld [vmem:[%s242 + $0xa0] sm:$0xff]
        %v508 = vld [vmem:[%s242 + $0xa8] sm:$0xff]
        %v509 = vld [vmem:[%s242 + $0xb0] sm:$0xff]
        %v510 = vld [vmem:[%s242 + $0xb8] sm:$0xff]
        %v511 = vld [vmem:[%s242 + $0xc0] sm:$0xff]
        %v512 = vld [vmem:[%s242 + $0xc8] sm:$0xff]
        %v513 = vld [vmem:[%s242 + $0xd0] sm:$0xff]
        %v514 = vld [vmem:[%s242 + $0xd8] sm:$0xff]
        %v515 = vld [vmem:[%s242 + $0xe0] sm:$0xff]
        %v516 = vld [vmem:[%s242 + $0xe8] sm:$0xff]
        %v517 = vld [vmem:[%s242 + $0xf0] sm:$0xff]
        %v518 = vld [vmem:[%s242 + $0xf8] sm:$0xff]
        %v519 = vld [vmem:[%s242 + $0x100] sm:$0xff]
        %v520 = vld [vmem:[%s242 + $0x108] sm:$0xff]
        %v521 = vld [vmem:[%s242 + $0x110] sm:$0xff]
        %v522 = vld [vmem:[%s242 + $0x118] sm:$0xff]
        %v523 = vld [vmem:[%s242 + $0x120] sm:$0xff]
        %v524 = vld [vmem:[%s242 + $0x128] sm:$0xff]
        %v525 = vld [vmem:[%s242 + $0x130] sm:$0xff]
        %v526 = vld [vmem:[%s242 + $0x138] sm:$0xff]
        %v527 = vld [vmem:[%s242 + $0x140] sm:$0xff]
        %v528 = vld [vmem:[%s242 + $0x148] sm:$0xff]
        %v529 = vld [vmem:[%s242 + $0x150] sm:$0xff]
        %v530 = vld [vmem:[%s242 + $0x158] sm:$0xff]
        %v531 = vld [vmem:[%s242 + $0x160] sm:$0xff]
        %v532 = vld [vmem:[%s242 + $0x168] sm:$0xff]
        %v533 = vld [vmem:[%s242 + $0x170] sm:$0xff]
        %v534 = vld [vmem:[%s242 + $0x178] sm:$0xff]
        %v535 = vld [vmem:[%s242 + $0x180] sm:$0xff]
        %v536 = vld [vmem:[%s242 + $0x188] sm:$0xff]
        %v537 = vld [vmem:[%s242 + $0x190] sm:$0xff]
        %v538 = vld [vmem:[%s242 + $0x198] sm:$0xff]
        %v539 = vld [vmem:[%s242 + $0x1a0] sm:$0xff]
        %v540 = vld [vmem:[%s242 + $0x1a8] sm:$0xff]
        %v541 = vld [vmem:[%s242 + $0x1b0] sm:$0xff]
        %v542 = vld [vmem:[%s242 + $0x1b8] sm:$0xff]
        %v543 = vld [vmem:[%s242 + $0x1c0] sm:$0xff]
        %v544 = vld [vmem:[%s242 + $0x1c8] sm:$0xff]
        %v545 = vld [vmem:[%s242 + $0x1d0] sm:$0xff]
        %v546 = vld [vmem:[%s242 + $0x1d8] sm:$0xff]
        %v547 = vld [vmem:[%s242 + $0x1e0] sm:$0xff]
        %v548 = vld [vmem:[%s242 + $0x1e8] sm:$0xff]
        %v549 = vld [vmem:[%s242 + $0x1f0] sm:$0xff]
        %v550 = vld [vmem:[%s242 + $0x1f8] sm:$0xff]
        %v551 = vld [vmem:[%s242 + $0x200] sm:$0xff]
        %v552 = vld [vmem:[%s242 + $0x208] sm:$0xff]
        %v553 = vld [vmem:[%s242 + $0x210] sm:$0xff]
        %v554 = vld [vmem:[%s242 + $0x218] sm:$0xff]
        %v555 = vld [vmem:[%s242 + $0x220] sm:$0xff]
        %v556 = vld [vmem:[%s242 + $0x228] sm:$0xff]
        %v557 = vld [vmem:[%s242 + $0x230] sm:$0xff]
        %v558 = vld [vmem:[%s242 + $0x238] sm:$0xff]
        %v559 = vld [vmem:[%s242 + $0x240] sm:$0xff]
        %v560 = vld [vmem:[%s242 + $0x248] sm:$0xff]
        %v561 = vld [vmem:[%s242 + $0x250] sm:$0xff]
        %v562 = vld [vmem:[%s242 + $0x258] sm:$0xff]
        %v563 = vld [vmem:[%s242 + $0x260] sm:$0xff]
        %v564 = vld [vmem:[%s242 + $0x268] sm:$0xff]
        %v565 = vld [vmem:[%s242 + $0x270] sm:$0xff]
        %v566 = vld [vmem:[%s242 + $0x278] sm:$0xff]
        %v567 = vld [vmem:[%s242 + $0x280] sm:$0xff]
        %v568 = vld [vmem:[%s242 + $0x288] sm:$0xff]
        %v569 = vld [vmem:[%s242 + $0x290] sm:$0xff]
        %v570 = vld [vmem:[%s242 + $0x298] sm:$0xff]
        %v571 = vld [vmem:[%s242 + $0x2a0] sm:$0xff]
        %v572 = vld [vmem:[%s242 + $0x2a8] sm:$0xff]
        %v573 = vld [vmem:[%s242 + $0x2b0] sm:$0xff]
        %v574 = vld [vmem:[%s242 + $0x2b8] sm:$0xff]
        %v575 = vld [vmem:[%s242 + $0x2c0] sm:$0xff]
        %v576 = vld [vmem:[%s242 + $0x2c8] sm:$0xff]
        %v577 = vld [vmem:[%s242 + $0x2d0] sm:$0xff]
        %v578 = vld [vmem:[%s242 + $0x2d8] sm:$0xff]
        %v579 = vld [vmem:[%s242 + $0x2e0] sm:$0xff]
        %v580 = vld [vmem:[%s242 + $0x2e8] sm:$0xff]
        %v581 = vld [vmem:[%s242 + $0x2f0] sm:$0xff]
        %v582 = vld [vmem:[%s242 + $0x2f8] sm:$0xff]
        %v583 = vld [vmem:[%s242 + $0x300] sm:$0xff]
        %v584 = vld [vmem:[%s242 + $0x308] sm:$0xff]
        %v585 = vld [vmem:[%s242 + $0x310] sm:$0xff]
        %v586 = vld [vmem:[%s242 + $0x318] sm:$0xff]
        %v587 = vld [vmem:[%s242 + $0x320] sm:$0xff]
        %v588 = vld [vmem:[%s242 + $0x328] sm:$0xff]
        %v589 = vld [vmem:[%s242 + $0x330] sm:$0xff]
        %v590 = vld [vmem:[%s242 + $0x338] sm:$0xff]
        %v591 = vld [vmem:[%s242 + $0x340] sm:$0xff]
        %v592 = vld [vmem:[%s242 + $0x348] sm:$0xff]
        %v593 = vld [vmem:[%s242 + $0x350] sm:$0xff]
        %v594 = vld [vmem:[%s242 + $0x358] sm:$0xff]
        %v595 = vld [vmem:[%s242 + $0x360] sm:$0xff]
        %v596 = vld [vmem:[%s242 + $0x368] sm:$0xff]
        %v597 = vld [vmem:[%s242 + $0x370] sm:$0xff]
        %v598 = vld [vmem:[%s242 + $0x378] sm:$0xff]
        %v599 = vld [vmem:[%s242 + $0x380] sm:$0xff]
        %v600 = vld [vmem:[%s242 + $0x388] sm:$0xff]
        %v601 = vld [vmem:[%s242 + $0x390] sm:$0xff]
        %v602 = vld [vmem:[%s242 + $0x398] sm:$0xff]
        %v603 = vld [vmem:[%s242 + $0x3a0] sm:$0xff]
        %v604 = vld [vmem:[%s242 + $0x3a8] sm:$0xff]
        %v605 = vld [vmem:[%s242 + $0x3b0] sm:$0xff]
        %v606 = vld [vmem:[%s242 + $0x3b8] sm:$0xff]
        %v607 = vld [vmem:[%s242 + $0x3c0] sm:$0xff]
        %v608 = vld [vmem:[%s242 + $0x3c8] sm:$0xff]
        %v609 = vld [vmem:[%s242 + $0x3d0] sm:$0xff]
        %v610 = vld [vmem:[%s242 + $0x3d8] sm:$0xff]
        %v611 = vld [vmem:[%s242 + $0x3e0] sm:$0xff]
        %v612 = vld [vmem:[%s242 + $0x3e8] sm:$0xff]
        %v613 = vld [vmem:[%s242 + $0x3f0] sm:$0xff]
        %v614 = vld [vmem:[%s242 + $0x3f8] sm:$0xff]
        %v743 = vunpack.c.l.b16 %v487
        %v744 = vunpack.c.h.b16 %v487
        %v745 = vunpack.c.l.b16 %v488
        %v746 = vunpack.c.h.b16 %v488
        %v747 = vunpack.c.l.b16 %v489
        %v748 = vunpack.c.h.b16 %v489
        %v749 = vunpack.c.l.b16 %v490
        %v750 = vunpack.c.h.b16 %v490
        %v751 = vunpack.c.l.b16 %v491
        %v752 = vunpack.c.h.b16 %v491
        %v753 = vunpack.c.l.b16 %v492
        %v754 = vunpack.c.h.b16 %v492
        %v755 = vunpack.c.l.b16 %v493
        %v756 = vunpack.c.h.b16 %v493
        %v757 = vunpack.c.l.b16 %v494
        %v758 = vunpack.c.h.b16 %v494
        %v759 = vunpack.c.l.b16 %v495
        %v760 = vunpack.c.h.b16 %v495
        %v761 = vunpack.c.l.b16 %v496
        %v762 = vunpack.c.h.b16 %v496
        %v763 = vunpack.c.l.b16 %v497
        %v764 = vunpack.c.h.b16 %v497
        %v765 = vunpack.c.l.b16 %v498
        %v766 = vunpack.c.h.b16 %v498
        %v767 = vunpack.c.l.b16 %v499
        %v768 = vunpack.c.h.b16 %v499
        %v769 = vunpack.c.l.b16 %v500
        %v770 = vunpack.c.h.b16 %v500
        %v771 = vunpack.c.l.b16 %v501
        %v772 = vunpack.c.h.b16 %v501
        %v773 = vunpack.c.l.b16 %v502
        %v774 = vunpack.c.h.b16 %v502
        %v775 = vunpack.c.l.b16 %v503
        %v776 = vunpack.c.h.b16 %v503
        %v777 = vunpack.c.l.b16 %v504
        %v778 = vunpack.c.h.b16 %v504
        %v779 = vunpack.c.l.b16 %v505
        %v780 = vunpack.c.h.b16 %v505
        %v781 = vunpack.c.l.b16 %v506
        %v782 = vunpack.c.h.b16 %v506
        %v783 = vunpack.c.l.b16 %v507
        %v784 = vunpack.c.h.b16 %v507
        %v785 = vunpack.c.l.b16 %v508
        %v786 = vunpack.c.h.b16 %v508
        %v787 = vunpack.c.l.b16 %v509
        %v788 = vunpack.c.h.b16 %v509
        %v789 = vunpack.c.l.b16 %v510
        %v790 = vunpack.c.h.b16 %v510
        %v791 = vunpack.c.l.b16 %v511
        %v792 = vunpack.c.h.b16 %v511
        %v793 = vunpack.c.l.b16 %v512
        %v794 = vunpack.c.h.b16 %v512
        %v795 = vunpack.c.l.b16 %v513
        %v796 = vunpack.c.h.b16 %v513
        %v797 = vunpack.c.l.b16 %v514
        %v798 = vunpack.c.h.b16 %v514
        %v799 = vunpack.c.l.b16 %v515
        %v800 = vunpack.c.h.b16 %v515
        %v801 = vunpack.c.l.b16 %v516
        %v802 = vunpack.c.h.b16 %v516
        %v803 = vunpack.c.l.b16 %v517
        %v804 = vunpack.c.h.b16 %v517
        %v805 = vunpack.c.l.b16 %v518
        %v806 = vunpack.c.h.b16 %v518
        %v807 = vunpack.c.l.b16 %v519
        %v808 = vunpack.c.h.b16 %v519
        %v809 = vunpack.c.l.b16 %v520
        %v810 = vunpack.c.h.b16 %v520
        %v811 = vunpack.c.l.b16 %v521
        %v812 = vunpack.c.h.b16 %v521
        %v813 = vunpack.c.l.b16 %v522
        %v814 = vunpack.c.h.b16 %v522
        %v815 = vunpack.c.l.b16 %v523
        %v816 = vunpack.c.h.b16 %v523
        %v817 = vunpack.c.l.b16 %v524
        %v818 = vunpack.c.h.b16 %v524
        %v819 = vunpack.c.l.b16 %v525
        %v820 = vunpack.c.h.b16 %v525
        %v821 = vunpack.c.l.b16 %v526
        %v822 = vunpack.c.h.b16 %v526
        %v823 = vunpack.c.l.b16 %v527
        %v824 = vunpack.c.h.b16 %v527
        %v825 = vunpack.c.l.b16 %v528
        %v826 = vunpack.c.h.b16 %v528
        %v827 = vunpack.c.l.b16 %v529
        %v828 = vunpack.c.h.b16 %v529
        %v829 = vunpack.c.l.b16 %v530
        %v830 = vunpack.c.h.b16 %v530
        %v831 = vunpack.c.l.b16 %v531
        %v832 = vunpack.c.h.b16 %v531
        %v833 = vunpack.c.l.b16 %v532
        %v834 = vunpack.c.h.b16 %v532
        %v835 = vunpack.c.l.b16 %v533
        %v836 = vunpack.c.h.b16 %v533
        %v837 = vunpack.c.l.b16 %v534
        %v838 = vunpack.c.h.b16 %v534
        %v839 = vunpack.c.l.b16 %v535
        %v840 = vunpack.c.h.b16 %v535
        %v841 = vunpack.c.l.b16 %v536
        %v842 = vunpack.c.h.b16 %v536
        %v843 = vunpack.c.l.b16 %v537
        %v844 = vunpack.c.h.b16 %v537
        %v845 = vunpack.c.l.b16 %v538
        %v846 = vunpack.c.h.b16 %v538
        %v847 = vunpack.c.l.b16 %v539
        %v848 = vunpack.c.h.b16 %v539
        %v849 = vunpack.c.l.b16 %v540
        %v850 = vunpack.c.h.b16 %v540
        %v851 = vunpack.c.l.b16 %v541
        %v852 = vunpack.c.h.b16 %v541
        %v853 = vunpack.c.l.b16 %v542
        %v854 = vunpack.c.h.b16 %v542
        %v855 = vunpack.c.l.b16 %v543
        %v856 = vunpack.c.h.b16 %v543
        %v857 = vunpack.c.l.b16 %v544
        %v858 = vunpack.c.h.b16 %v544
        %v859 = vunpack.c.l.b16 %v545
        %v860 = vunpack.c.h.b16 %v545
        %v861 = vunpack.c.l.b16 %v546
        %v862 = vunpack.c.h.b16 %v546
        %v863 = vunpack.c.l.b16 %v547
        %v864 = vunpack.c.h.b16 %v547
        %v865 = vunpack.c.l.b16 %v548
        %v866 = vunpack.c.h.b16 %v548
        %v867 = vunpack.c.l.b16 %v549
        %v868 = vunpack.c.h.b16 %v549
        %v869 = vunpack.c.l.b16 %v550
        %v870 = vunpack.c.h.b16 %v550
        %v871 = vunpack.c.l.b16 %v551
        %v872 = vunpack.c.h.b16 %v551
        %v873 = vunpack.c.l.b16 %v552
        %v874 = vunpack.c.h.b16 %v552
        %v875 = vunpack.c.l.b16 %v553
        %v876 = vunpack.c.h.b16 %v553
        %v877 = vunpack.c.l.b16 %v554
        %v878 = vunpack.c.h.b16 %v554
        %v879 = vunpack.c.l.b16 %v555
        %v880 = vunpack.c.h.b16 %v555
        %v881 = vunpack.c.l.b16 %v556
        %v882 = vunpack.c.h.b16 %v556
        %v883 = vunpack.c.l.b16 %v557
        %v884 = vunpack.c.h.b16 %v557
        %v885 = vunpack.c.l.b16 %v558
        %v886 = vunpack.c.h.b16 %v558
        %v887 = vunpack.c.l.b16 %v559
        %v888 = vunpack.c.h.b16 %v559
        %v889 = vunpack.c.l.b16 %v560
        %v890 = vunpack.c.h.b16 %v560
        %v891 = vunpack.c.l.b16 %v561
        %v892 = vunpack.c.h.b16 %v561
        %v893 = vunpack.c.l.b16 %v562
        %v894 = vunpack.c.h.b16 %v562
        %v895 = vunpack.c.l.b16 %v563
        %v896 = vunpack.c.h.b16 %v563
        %v897 = vunpack.c.l.b16 %v564
        %v898 = vunpack.c.h.b16 %v564
        %v899 = vunpack.c.l.b16 %v565
        %v900 = vunpack.c.h.b16 %v565
        %v901 = vunpack.c.l.b16 %v566
        %v902 = vunpack.c.h.b16 %v566
        %v903 = vunpack.c.l.b16 %v567
        %v904 = vunpack.c.h.b16 %v567
        %v905 = vunpack.c.l.b16 %v568
        %v906 = vunpack.c.h.b16 %v568
        %v907 = vunpack.c.l.b16 %v569
        %v908 = vunpack.c.h.b16 %v569
        %v909 = vunpack.c.l.b16 %v570
        %v910 = vunpack.c.h.b16 %v570
        %v911 = vunpack.c.l.b16 %v571
        %v912 = vunpack.c.h.b16 %v571
        %v913 = vunpack.c.l.b16 %v572
        %v914 = vunpack.c.h.b16 %v572
        %v915 = vunpack.c.l.b16 %v573
        %v916 = vunpack.c.h.b16 %v573
        %v917 = vunpack.c.l.b16 %v574
        %v918 = vunpack.c.h.b16 %v574
        %v919 = vunpack.c.l.b16 %v575
        %v920 = vunpack.c.h.b16 %v575
        %v921 = vunpack.c.l.b16 %v576
        %v922 = vunpack.c.h.b16 %v576
        %v923 = vunpack.c.l.b16 %v577
        %v924 = vunpack.c.h.b16 %v577
        %v925 = vunpack.c.l.b16 %v578
        %v926 = vunpack.c.h.b16 %v578
        %v927 = vunpack.c.l.b16 %v579
        %v928 = vunpack.c.h.b16 %v579
        %v929 = vunpack.c.l.b16 %v580
        %v930 = vunpack.c.h.b16 %v580
        %v931 = vunpack.c.l.b16 %v581
        %v932 = vunpack.c.h.b16 %v581
        %v933 = vunpack.c.l.b16 %v582
        %v934 = vunpack.c.h.b16 %v582
        %v935 = vunpack.c.l.b16 %v583
        %v936 = vunpack.c.h.b16 %v583
        %v937 = vunpack.c.l.b16 %v584
        %v938 = vunpack.c.h.b16 %v584
        %v939 = vunpack.c.l.b16 %v585
        %v940 = vunpack.c.h.b16 %v585
        %v941 = vunpack.c.l.b16 %v586
        %v942 = vunpack.c.h.b16 %v586
        %v943 = vunpack.c.l.b16 %v587
        %v944 = vunpack.c.h.b16 %v587
        %v945 = vunpack.c.l.b16 %v588
        %v946 = vunpack.c.h.b16 %v588
        %v947 = vunpack.c.l.b16 %v589
        %v948 = vunpack.c.h.b16 %v589
        %v949 = vunpack.c.l.b16 %v590
        %v950 = vunpack.c.h.b16 %v590
        %v951 = vunpack.c.l.b16 %v591
        %v952 = vunpack.c.h.b16 %v591
        %v953 = vunpack.c.l.b16 %v592
        %v954 = vunpack.c.h.b16 %v592
        %v955 = vunpack.c.l.b16 %v593
        %v956 = vunpack.c.h.b16 %v593
        %v957 = vunpack.c.l.b16 %v594
        %v958 = vunpack.c.h.b16 %v594
        %v959 = vunpack.c.l.b16 %v595
        %v960 = vunpack.c.h.b16 %v595
        %v961 = vunpack.c.l.b16 %v596
        %v962 = vunpack.c.h.b16 %v596
        %v963 = vunpack.c.l.b16 %v597
        %v964 = vunpack.c.h.b16 %v597
        %v965 = vunpack.c.l.b16 %v598
        %v966 = vunpack.c.h.b16 %v598
        %v967 = vunpack.c.l.b16 %v599
        %v968 = vunpack.c.h.b16 %v599
        %v969 = vunpack.c.l.b16 %v600
        %v970 = vunpack.c.h.b16 %v600
        %v971 = vunpack.c.l.b16 %v601
        %v972 = vunpack.c.h.b16 %v601
        %v973 = vunpack.c.l.b16 %v602
        %v974 = vunpack.c.h.b16 %v602
        %v975 = vunpack.c.l.b16 %v603
        %v976 = vunpack.c.h.b16 %v603
        %v977 = vunpack.c.l.b16 %v604
        %v978 = vunpack.c.h.b16 %v604
        %v979 = vunpack.c.l.b16 %v605
        %v980 = vunpack.c.h.b16 %v605
        %v981 = vunpack.c.l.b16 %v606
        %v982 = vunpack.c.h.b16 %v606
        %v983 = vunpack.c.l.b16 %v607
        %v984 = vunpack.c.h.b16 %v607
        %v985 = vunpack.c.l.b16 %v608
        %v986 = vunpack.c.h.b16 %v608
        %v987 = vunpack.c.l.b16 %v609
        %v988 = vunpack.c.h.b16 %v609
        %v989 = vunpack.c.l.b16 %v610
        %v990 = vunpack.c.h.b16 %v610
        %v991 = vunpack.c.l.b16 %v611
        %v992 = vunpack.c.h.b16 %v611
        %v993 = vunpack.c.l.b16 %v612
        %v994 = vunpack.c.h.b16 %v612
        %v995 = vunpack.c.l.b16 %v613
        %v996 = vunpack.c.h.b16 %v613
        %v997 = vunpack.c.l.b16 %v614
        %v998 = vunpack.c.h.b16 %v614
        %v999 = vpack.c.b16 %v747, %v743
        %v1000 = vpack.c.b16 %v748, %v744
        %v1001 = vpack.c.b16 %v749, %v745
        %v1002 = vpack.c.b16 %v750, %v746
        %v1003 = vpack.c.b16 %v755, %v751
        %v1004 = vpack.c.b16 %v756, %v752
        %v1005 = vpack.c.b16 %v757, %v753
        %v1006 = vpack.c.b16 %v758, %v754
        %v1007 = vpack.c.b16 %v763, %v759
        %v1008 = vpack.c.b16 %v764, %v760
        %v1009 = vpack.c.b16 %v765, %v761
        %v1010 = vpack.c.b16 %v766, %v762
        %v1011 = vpack.c.b16 %v771, %v767
        %v1012 = vpack.c.b16 %v772, %v768
        %v1013 = vpack.c.b16 %v773, %v769
        %v1014 = vpack.c.b16 %v774, %v770
        %v1015 = vpack.c.b16 %v779, %v775
        %v1016 = vpack.c.b16 %v780, %v776
        %v1017 = vpack.c.b16 %v781, %v777
        %v1018 = vpack.c.b16 %v782, %v778
        %v1019 = vpack.c.b16 %v787, %v783
        %v1020 = vpack.c.b16 %v788, %v784
        %v1021 = vpack.c.b16 %v789, %v785
        %v1022 = vpack.c.b16 %v790, %v786
        %v1023 = vpack.c.b16 %v795, %v791
        %v1024 = vpack.c.b16 %v796, %v792
        %v1025 = vpack.c.b16 %v797, %v793
        %v1026 = vpack.c.b16 %v798, %v794
        %v1027 = vpack.c.b16 %v803, %v799
        %v1028 = vpack.c.b16 %v804, %v800
        %v1029 = vpack.c.b16 %v805, %v801
        %v1030 = vpack.c.b16 %v806, %v802
        %v1031 = vpack.c.b16 %v811, %v807
        %v1032 = vpack.c.b16 %v812, %v808
        %v1033 = vpack.c.b16 %v813, %v809
        %v1034 = vpack.c.b16 %v814, %v810
        %v1035 = vpack.c.b16 %v819, %v815
        %v1036 = vpack.c.b16 %v820, %v816
        %v1037 = vpack.c.b16 %v821, %v817
        %v1038 = vpack.c.b16 %v822, %v818
        %v1039 = vpack.c.b16 %v827, %v823
        %v1040 = vpack.c.b16 %v828, %v824
        %v1041 = vpack.c.b16 %v829, %v825
        %v1042 = vpack.c.b16 %v830, %v826
        %v1043 = vpack.c.b16 %v835, %v831
        %v1044 = vpack.c.b16 %v836, %v832
        %v1045 = vpack.c.b16 %v837, %v833
        %v1046 = vpack.c.b16 %v838, %v834
        %v1047 = vpack.c.b16 %v843, %v839
        %v1048 = vpack.c.b16 %v844, %v840
        %v1049 = vpack.c.b16 %v845, %v841
        %v1050 = vpack.c.b16 %v846, %v842
        %v1051 = vpack.c.b16 %v851, %v847
        %v1052 = vpack.c.b16 %v852, %v848
        %v1053 = vpack.c.b16 %v853, %v849
        %v1054 = vpack.c.b16 %v854, %v850
        %v1055 = vpack.c.b16 %v859, %v855
        %v1056 = vpack.c.b16 %v860, %v856
        %v1057 = vpack.c.b16 %v861, %v857
        %v1058 = vpack.c.b16 %v862, %v858
        %v1059 = vpack.c.b16 %v867, %v863
        %v1060 = vpack.c.b16 %v868, %v864
        %v1061 = vpack.c.b16 %v869, %v865
        %v1062 = vpack.c.b16 %v870, %v866
        %v1063 = vpack.c.b16 %v875, %v871
        %v1064 = vpack.c.b16 %v876, %v872
        %v1065 = vpack.c.b16 %v877, %v873
        %v1066 = vpack.c.b16 %v878, %v874
        %v1067 = vpack.c.b16 %v883, %v879
        %v1068 = vpack.c.b16 %v884, %v880
        %v1069 = vpack.c.b16 %v885, %v881
        %v1070 = vpack.c.b16 %v886, %v882
        %v1071 = vpack.c.b16 %v891, %v887
        %v1072 = vpack.c.b16 %v892, %v888
        %v1073 = vpack.c.b16 %v893, %v889
        %v1074 = vpack.c.b16 %v894, %v890
        %v1075 = vpack.c.b16 %v899, %v895
        %v1076 = vpack.c.b16 %v900, %v896
        %v1077 = vpack.c.b16 %v901, %v897
        %v1078 = vpack.c.b16 %v902, %v898
        %v1079 = vpack.c.b16 %v907, %v903
        %v1080 = vpack.c.b16 %v908, %v904
        %v1081 = vpack.c.b16 %v909, %v905
        %v1082 = vpack.c.b16 %v910, %v906
        %v1083 = vpack.c.b16 %v915, %v911
        %v1084 = vpack.c.b16 %v916, %v912
        %v1085 = vpack.c.b16 %v917, %v913
        %v1086 = vpack.c.b16 %v918, %v914
        %v1087 = vpack.c.b16 %v923, %v919
        %v1088 = vpack.c.b16 %v924, %v920
        %v1089 = vpack.c.b16 %v925, %v921
        %v1090 = vpack.c.b16 %v926, %v922
        %v1091 = vpack.c.b16 %v931, %v927
        %v1092 = vpack.c.b16 %v932, %v928
        %v1093 = vpack.c.b16 %v933, %v929
        %v1094 = vpack.c.b16 %v934, %v930
        %v1095 = vpack.c.b16 %v939, %v935
        %v1096 = vpack.c.b16 %v940, %v936
        %v1097 = vpack.c.b16 %v941, %v937
        %v1098 = vpack.c.b16 %v942, %v938
        %v1099 = vpack.c.b16 %v947, %v943
        %v1100 = vpack.c.b16 %v948, %v944
        %v1101 = vpack.c.b16 %v949, %v945
        %v1102 = vpack.c.b16 %v950, %v946
        %v1103 = vpack.c.b16 %v955, %v951
        %v1104 = vpack.c.b16 %v956, %v952
        %v1105 = vpack.c.b16 %v957, %v953
        %v1106 = vpack.c.b16 %v958, %v954
        %v1107 = vpack.c.b16 %v963, %v959
        %v1108 = vpack.c.b16 %v964, %v960
        %v1109 = vpack.c.b16 %v965, %v961
        %v1110 = vpack.c.b16 %v966, %v962
        %v1111 = vpack.c.b16 %v971, %v967
        %v1112 = vpack.c.b16 %v972, %v968
        %v1113 = vpack.c.b16 %v973, %v969
        %v1114 = vpack.c.b16 %v974, %v970
        %v1115 = vpack.c.b16 %v979, %v975
        %v1116 = vpack.c.b16 %v980, %v976
        %v1117 = vpack.c.b16 %v981, %v977
        %v1118 = vpack.c.b16 %v982, %v978
        %v1119 = vpack.c.b16 %v987, %v983
        %v1120 = vpack.c.b16 %v988, %v984
        %v1121 = vpack.c.b16 %v989, %v985
        %v1122 = vpack.c.b16 %v990, %v986
        %v1123 = vpack.c.b16 %v995, %v991
        %v1124 = vpack.c.b16 %v996, %v992
        %v1125 = vpack.c.b16 %v997, %v993
        %v1126 = vpack.c.b16 %v998, %v994
        %v1319 = vunpack.c.l.b16 %v359
        %v1320 = vunpack.c.l.b16 %v360
        %v1321 = vunpack.c.l.b16 %v361
        %v1322 = vunpack.c.l.b16 %v362
        %v1323 = vunpack.c.l.b16 %v363
        %v1324 = vunpack.c.l.b16 %v364
        %v1325 = vunpack.c.l.b16 %v365
        %v1326 = vunpack.c.l.b16 %v366
        %v1327 = vunpack.c.l.b16 %v367
        %v1328 = vunpack.c.l.b16 %v368
        %v1329 = vunpack.c.l.b16 %v369
        %v1330 = vunpack.c.l.b16 %v370
        %v1331 = vunpack.c.l.b16 %v371
        %v1332 = vunpack.c.l.b16 %v372
        %v1333 = vunpack.c.l.b16 %v373
        %v1334 = vunpack.c.l.b16 %v374
        %v1335 = vunpack.c.l.b16 %v375
        %v1336 = vunpack.c.l.b16 %v376
        %v1337 = vunpack.c.l.b16 %v377
        %v1338 = vunpack.c.l.b16 %v378
        %v1339 = vunpack.c.l.b16 %v379
        %v1340 = vunpack.c.l.b16 %v380
        %v1341 = vunpack.c.l.b16 %v381
        %v1342 = vunpack.c.l.b16 %v382
        %v1343 = vunpack.c.l.b16 %v383
        %v1344 = vunpack.c.l.b16 %v384
        %v1345 = vunpack.c.l.b16 %v385
        %v1346 = vunpack.c.l.b16 %v386
        %v1347 = vunpack.c.l.b16 %v387
        %v1348 = vunpack.c.l.b16 %v388
        %v1349 = vunpack.c.l.b16 %v389
        %v1350 = vunpack.c.l.b16 %v390
        %v1351 = vunpack.c.l.b16 %v391
        %v1352 = vunpack.c.l.b16 %v392
        %v1353 = vunpack.c.l.b16 %v393
        %v1354 = vunpack.c.l.b16 %v394
        %v1355 = vunpack.c.l.b16 %v395
        %v1356 = vunpack.c.l.b16 %v396
        %v1357 = vunpack.c.l.b16 %v397
        %v1358 = vunpack.c.l.b16 %v398
        %v1359 = vunpack.c.l.b16 %v399
        %v1360 = vunpack.c.l.b16 %v400
        %v1361 = vunpack.c.l.b16 %v401
        %v1362 = vunpack.c.l.b16 %v402
        %v1363 = vunpack.c.l.b16 %v403
        %v1364 = vunpack.c.l.b16 %v404
        %v1365 = vunpack.c.l.b16 %v405
        %v1366 = vunpack.c.l.b16 %v406
        %v1367 = vunpack.c.l.b16 %v407
        %v1368 = vunpack.c.l.b16 %v408
        %v1369 = vunpack.c.l.b16 %v409
        %v1370 = vunpack.c.l.b16 %v410
        %v1371 = vunpack.c.l.b16 %v411
        %v1372 = vunpack.c.l.b16 %v412
        %v1373 = vunpack.c.l.b16 %v413
        %v1374 = vunpack.c.l.b16 %v414
        %v1375 = vunpack.c.l.b16 %v415
        %v1376 = vunpack.c.l.b16 %v416
        %v1377 = vunpack.c.l.b16 %v417
        %v1378 = vunpack.c.l.b16 %v418
        %v1379 = vunpack.c.l.b16 %v419
        %v1380 = vunpack.c.l.b16 %v420
        %v1381 = vunpack.c.l.b16 %v421
        %v1382 = vunpack.c.l.b16 %v422
        %v1383 = vpack.c.b16 %v1320, %v1319
        %v1384 = vpack.c.b16 %v1322, %v1321
        %v1385 = vpack.c.b16 %v1324, %v1323
        %v1386 = vpack.c.b16 %v1326, %v1325
        %v1387 = vpack.c.b16 %v1328, %v1327
        %v1388 = vpack.c.b16 %v1330, %v1329
        %v1389 = vpack.c.b16 %v1332, %v1331
        %v1390 = vpack.c.b16 %v1334, %v1333
        %v1391 = vpack.c.b16 %v1336, %v1335
        %v1392 = vpack.c.b16 %v1338, %v1337
        %v1393 = vpack.c.b16 %v1340, %v1339
        %v1394 = vpack.c.b16 %v1342, %v1341
        %v1395 = vpack.c.b16 %v1344, %v1343
        %v1396 = vpack.c.b16 %v1346, %v1345
        %v1397 = vpack.c.b16 %v1348, %v1347
        %v1398 = vpack.c.b16 %v1350, %v1349
        %v1399 = vpack.c.b16 %v1352, %v1351
        %v1400 = vpack.c.b16 %v1354, %v1353
        %v1401 = vpack.c.b16 %v1356, %v1355
        %v1402 = vpack.c.b16 %v1358, %v1357
        %v1403 = vpack.c.b16 %v1360, %v1359
        %v1404 = vpack.c.b16 %v1362, %v1361
        %v1405 = vpack.c.b16 %v1364, %v1363
        %v1406 = vpack.c.b16 %v1366, %v1365
        %v1407 = vpack.c.b16 %v1368, %v1367
        %v1408 = vpack.c.b16 %v1370, %v1369
        %v1409 = vpack.c.b16 %v1372, %v1371
        %v1410 = vpack.c.b16 %v1374, %v1373
        %v1411 = vpack.c.b16 %v1376, %v1375
        %v1412 = vpack.c.b16 %v1378, %v1377
        %v1413 = vpack.c.b16 %v1380, %v1379
        %v1414 = vpack.c.b16 %v1382, %v1381
        %1447 = vmatpush.bf16.msra.mxu0 %v1390
        %1448 = vmatpush.bf16.msra.mxu0 %v1389
        %1449 = vmatpush.bf16.msra.mxu0 %v1388
        %1450 = vmatpush.bf16.msra.mxu0 %v1387
        %1451 = vmatpush.bf16.msra.mxu0 %v1386
        %1452 = vmatpush.bf16.msra.mxu0 %v1385
        %1453 = vmatpush.bf16.msra.mxu0 %v1384
        %1454 = vmatpush.bf16.msra.mxu0 %v1383
        %1455 = vmatmul.bf16.gmra.mxu0 %v999
        %v1456 = vpop.f32.mrf.mxu0
        %v1457 = vadd.f32 0.0, %v1456
        %v1458 = vpop.f32.mrf.mxu0
        %v1459 = vadd.f32 0.0, %v1458
        %1460 = vmatmul.bf16.gmra.mxu0 %v1003
        %v1461 = vpop.f32.mrf.mxu0
        %v1462 = vadd.f32 0.0, %v1461
        %v1463 = vpop.f32.mrf.mxu0
        %v1464 = vadd.f32 0.0, %v1463
        %1465 = vmatmul.bf16.gmra.mxu0 %v1007
        %v1466 = vpop.f32.mrf.mxu0
        %v1467 = vadd.f32 0.0, %v1466
        %v1468 = vpop.f32.mrf.mxu0
        %v1469 = vadd.f32 0.0, %v1468
        %1470 = vmatmul.bf16.gmra.mxu0 %v1011
        %v1471 = vpop.f32.mrf.mxu0
        %v1472 = vadd.f32 0.0, %v1471
        %v1473 = vpop.f32.mrf.mxu0
        %v1474 = vadd.f32 0.0, %v1473
        %1475 = vmatmul.bf16.gmra.mxu0 %v1015
        %v1476 = vpop.f32.mrf.mxu0
        %v1477 = vadd.f32 0.0, %v1476
        %v1478 = vpop.f32.mrf.mxu0
        %v1479 = vadd.f32 0.0, %v1478
        %1480 = vmatmul.bf16.gmra.mxu0 %v1019
        %v1481 = vpop.f32.mrf.mxu0
        %v1482 = vadd.f32 0.0, %v1481
        %v1483 = vpop.f32.mrf.mxu0
        %v1484 = vadd.f32 0.0, %v1483
        %1485 = vmatmul.bf16.gmra.mxu0 %v1023
        %v1486 = vpop.f32.mrf.mxu0
        %v1487 = vadd.f32 0.0, %v1486
        %v1488 = vpop.f32.mrf.mxu0
        %v1489 = vadd.f32 0.0, %v1488
        %1490 = vmatmul.bf16.gmra.mxu0 %v1027
        %v1491 = vpop.f32.mrf.mxu0
        %v1492 = vadd.f32 0.0, %v1491
        %v1493 = vpop.f32.mrf.mxu0
        %v1494 = vadd.f32 0.0, %v1493
        %1495 = vmatmul.bf16.gmra.mxu0 %v1031
        %v1496 = vpop.f32.mrf.mxu0
        %v1497 = vadd.f32 0.0, %v1496
        %v1498 = vpop.f32.mrf.mxu0
        %v1499 = vadd.f32 0.0, %v1498
        %1500 = vmatmul.bf16.gmra.mxu0 %v1035
        %v1501 = vpop.f32.mrf.mxu0
        %v1502 = vadd.f32 0.0, %v1501
        %v1503 = vpop.f32.mrf.mxu0
        %v1504 = vadd.f32 0.0, %v1503
        %1505 = vmatmul.bf16.gmra.mxu0 %v1039
        %v1506 = vpop.f32.mrf.mxu0
        %v1507 = vadd.f32 0.0, %v1506
        %v1508 = vpop.f32.mrf.mxu0
        %v1509 = vadd.f32 0.0, %v1508
        %1510 = vmatmul.bf16.gmra.mxu0 %v1043
        %v1511 = vpop.f32.mrf.mxu0
        %v1512 = vadd.f32 0.0, %v1511
        %v1513 = vpop.f32.mrf.mxu0
        %v1514 = vadd.f32 0.0, %v1513
        %1515 = vmatmul.bf16.gmra.mxu0 %v1047
        %v1516 = vpop.f32.mrf.mxu0
        %v1517 = vadd.f32 0.0, %v1516
        %v1518 = vpop.f32.mrf.mxu0
        %v1519 = vadd.f32 0.0, %v1518
        %1520 = vmatmul.bf16.gmra.mxu0 %v1051
        %v1521 = vpop.f32.mrf.mxu0
        %v1522 = vadd.f32 0.0, %v1521
        %v1523 = vpop.f32.mrf.mxu0
        %v1524 = vadd.f32 0.0, %v1523
        %1525 = vmatmul.bf16.gmra.mxu0 %v1055
        %v1526 = vpop.f32.mrf.mxu0
        %v1527 = vadd.f32 0.0, %v1526
        %v1528 = vpop.f32.mrf.mxu0
        %v1529 = vadd.f32 0.0, %v1528
        %1530 = vmatmul.bf16.gmra.mxu0 %v1059
        %v1531 = vpop.f32.mrf.mxu0
        %v1532 = vadd.f32 0.0, %v1531
        %v1533 = vpop.f32.mrf.mxu0
        %v1534 = vadd.f32 0.0, %v1533
        %1535 = vmatmul.bf16.gmra.mxu0 %v1063
        %v1536 = vpop.f32.mrf.mxu0
        %v1537 = vadd.f32 0.0, %v1536
        %v1538 = vpop.f32.mrf.mxu0
        %v1539 = vadd.f32 0.0, %v1538
        %1540 = vmatmul.bf16.gmra.mxu0 %v1067
        %v1541 = vpop.f32.mrf.mxu0
        %v1542 = vadd.f32 0.0, %v1541
        %v1543 = vpop.f32.mrf.mxu0
        %v1544 = vadd.f32 0.0, %v1543
        %1545 = vmatmul.bf16.gmra.mxu0 %v1071
        %v1546 = vpop.f32.mrf.mxu0
        %v1547 = vadd.f32 0.0, %v1546
        %v1548 = vpop.f32.mrf.mxu0
        %v1549 = vadd.f32 0.0, %v1548
        %1550 = vmatmul.bf16.gmra.mxu0 %v1075
        %v1551 = vpop.f32.mrf.mxu0
        %v1552 = vadd.f32 0.0, %v1551
        %v1553 = vpop.f32.mrf.mxu0
        %v1554 = vadd.f32 0.0, %v1553
        %1555 = vmatmul.bf16.gmra.mxu0 %v1079
        %v1556 = vpop.f32.mrf.mxu0
        %v1557 = vadd.f32 0.0, %v1556
        %v1558 = vpop.f32.mrf.mxu0
        %v1559 = vadd.f32 0.0, %v1558
        %1560 = vmatmul.bf16.gmra.mxu0 %v1083
        %v1561 = vpop.f32.mrf.mxu0
        %v1562 = vadd.f32 0.0, %v1561
        %v1563 = vpop.f32.mrf.mxu0
        %v1564 = vadd.f32 0.0, %v1563
        %1565 = vmatmul.bf16.gmra.mxu0 %v1087
        %v1566 = vpop.f32.mrf.mxu0
        %v1567 = vadd.f32 0.0, %v1566
        %v1568 = vpop.f32.mrf.mxu0
        %v1569 = vadd.f32 0.0, %v1568
        %1570 = vmatmul.bf16.gmra.mxu0 %v1091
        %v1571 = vpop.f32.mrf.mxu0
        %v1572 = vadd.f32 0.0, %v1571
        %v1573 = vpop.f32.mrf.mxu0
        %v1574 = vadd.f32 0.0, %v1573
        %1575 = vmatmul.bf16.gmra.mxu0 %v1095
        %v1576 = vpop.f32.mrf.mxu0
        %v1577 = vadd.f32 0.0, %v1576
        %v1578 = vpop.f32.mrf.mxu0
        %v1579 = vadd.f32 0.0, %v1578
        %1580 = vmatmul.bf16.gmra.mxu0 %v1099
        %v1581 = vpop.f32.mrf.mxu0
        %v1582 = vadd.f32 0.0, %v1581
        %v1583 = vpop.f32.mrf.mxu0
        %v1584 = vadd.f32 0.0, %v1583
        %1585 = vmatmul.bf16.gmra.mxu0 %v1103
        %v1586 = vpop.f32.mrf.mxu0
        %v1587 = vadd.f32 0.0, %v1586
        %v1588 = vpop.f32.mrf.mxu0
        %v1589 = vadd.f32 0.0, %v1588
        %1590 = vmatmul.bf16.gmra.mxu0 %v1107
        %v1591 = vpop.f32.mrf.mxu0
        %v1592 = vadd.f32 0.0, %v1591
        %v1593 = vpop.f32.mrf.mxu0
        %v1594 = vadd.f32 0.0, %v1593
        %1595 = vmatmul.bf16.gmra.mxu0 %v1111
        %v1596 = vpop.f32.mrf.mxu0
        %v1597 = vadd.f32 0.0, %v1596
        %v1598 = vpop.f32.mrf.mxu0
        %v1599 = vadd.f32 0.0, %v1598
        %1600 = vmatmul.bf16.gmra.mxu0 %v1115
        %v1601 = vpop.f32.mrf.mxu0
        %v1602 = vadd.f32 0.0, %v1601
        %v1603 = vpop.f32.mrf.mxu0
        %v1604 = vadd.f32 0.0, %v1603
        %1605 = vmatmul.bf16.gmra.mxu0 %v1119
        %v1606 = vpop.f32.mrf.mxu0
        %v1607 = vadd.f32 0.0, %v1606
        %v1608 = vpop.f32.mrf.mxu0
        %v1609 = vadd.f32 0.0, %v1608
        %1610 = vmatmul.bf16.gmra.mxu0 %v1123
        %v1611 = vpop.f32.mrf.mxu0
        %v1612 = vadd.f32 0.0, %v1611
        %v1613 = vpop.f32.mrf.mxu0
        %v1614 = vadd.f32 0.0, %v1613
        %1615 = vdwg.mxu0
        %1616 = vmatpush.bf16.msra.mxu0 %v1398
        %1617 = vmatpush.bf16.msra.mxu0 %v1397
        %1618 = vmatpush.bf16.msra.mxu0 %v1396
        %1619 = vmatpush.bf16.msra.mxu0 %v1395
        %1620 = vmatpush.bf16.msra.mxu0 %v1394
        %1621 = vmatpush.bf16.msra.mxu0 %v1393
        %1622 = vmatpush.bf16.msra.mxu0 %v1392
        %1623 = vmatpush.bf16.msra.mxu0 %v1391
        %1624 = vmatmul.bf16.gmra.mxu0 %v1000
        %v1625 = vpop.f32.mrf.mxu0
        %v1626 = vadd.f32 %v1457, %v1625
        %v1627 = vpop.f32.mrf.mxu0
        %v1628 = vadd.f32 %v1459, %v1627
        %1629 = vmatmul.bf16.gmra.mxu0 %v1004
        %v1630 = vpop.f32.mrf.mxu0
        %v1631 = vadd.f32 %v1462, %v1630
        %v1632 = vpop.f32.mrf.mxu0
        %v1633 = vadd.f32 %v1464, %v1632
        %1634 = vmatmul.bf16.gmra.mxu0 %v1008
        %v1635 = vpop.f32.mrf.mxu0
        %v1636 = vadd.f32 %v1467, %v1635
        %v1637 = vpop.f32.mrf.mxu0
        %v1638 = vadd.f32 %v1469, %v1637
        %1639 = vmatmul.bf16.gmra.mxu0 %v1012
        %v1640 = vpop.f32.mrf.mxu0
        %v1641 = vadd.f32 %v1472, %v1640
        %v1642 = vpop.f32.mrf.mxu0
        %v1643 = vadd.f32 %v1474, %v1642
        %1644 = vmatmul.bf16.gmra.mxu0 %v1016
        %v1645 = vpop.f32.mrf.mxu0
        %v1646 = vadd.f32 %v1477, %v1645
        %v1647 = vpop.f32.mrf.mxu0
        %v1648 = vadd.f32 %v1479, %v1647
        %1649 = vmatmul.bf16.gmra.mxu0 %v1020
        %v1650 = vpop.f32.mrf.mxu0
        %v1651 = vadd.f32 %v1482, %v1650
        %v1652 = vpop.f32.mrf.mxu0
        %v1653 = vadd.f32 %v1484, %v1652
        %1654 = vmatmul.bf16.gmra.mxu0 %v1024
        %v1655 = vpop.f32.mrf.mxu0
        %v1656 = vadd.f32 %v1487, %v1655
        %v1657 = vpop.f32.mrf.mxu0
        %v1658 = vadd.f32 %v1489, %v1657
        %1659 = vmatmul.bf16.gmra.mxu0 %v1028
        %v1660 = vpop.f32.mrf.mxu0
        %v1661 = vadd.f32 %v1492, %v1660
        %v1662 = vpop.f32.mrf.mxu0
        %v1663 = vadd.f32 %v1494, %v1662
        %1664 = vmatmul.bf16.gmra.mxu0 %v1032
        %v1665 = vpop.f32.mrf.mxu0
        %v1666 = vadd.f32 %v1497, %v1665
        %v1667 = vpop.f32.mrf.mxu0
        %v1668 = vadd.f32 %v1499, %v1667
        %1669 = vmatmul.bf16.gmra.mxu0 %v1036
        %v1670 = vpop.f32.mrf.mxu0
        %v1671 = vadd.f32 %v1502, %v1670
        %v1672 = vpop.f32.mrf.mxu0
        %v1673 = vadd.f32 %v1504, %v1672
        %1674 = vmatmul.bf16.gmra.mxu0 %v1040
        %v1675 = vpop.f32.mrf.mxu0
        %v1676 = vadd.f32 %v1507, %v1675
        %v1677 = vpop.f32.mrf.mxu0
        %v1678 = vadd.f32 %v1509, %v1677
        %1679 = vmatmul.bf16.gmra.mxu0 %v1044
        %v1680 = vpop.f32.mrf.mxu0
        %v1681 = vadd.f32 %v1512, %v1680
        %v1682 = vpop.f32.mrf.mxu0
        %v1683 = vadd.f32 %v1514, %v1682
        %1684 = vmatmul.bf16.gmra.mxu0 %v1048
        %v1685 = vpop.f32.mrf.mxu0
        %v1686 = vadd.f32 %v1517, %v1685
        %v1687 = vpop.f32.mrf.mxu0
        %v1688 = vadd.f32 %v1519, %v1687
        %1689 = vmatmul.bf16.gmra.mxu0 %v1052
        %v1690 = vpop.f32.mrf.mxu0
        %v1691 = vadd.f32 %v1522, %v1690
        %v1692 = vpop.f32.mrf.mxu0
        %v1693 = vadd.f32 %v1524, %v1692
        %1694 = vmatmul.bf16.gmra.mxu0 %v1056
        %v1695 = vpop.f32.mrf.mxu0
        %v1696 = vadd.f32 %v1527, %v1695
        %v1697 = vpop.f32.mrf.mxu0
        %v1698 = vadd.f32 %v1529, %v1697
        %1699 = vmatmul.bf16.gmra.mxu0 %v1060
        %v1700 = vpop.f32.mrf.mxu0
        %v1701 = vadd.f32 %v1532, %v1700
        %v1702 = vpop.f32.mrf.mxu0
        %v1703 = vadd.f32 %v1534, %v1702
        %1704 = vmatmul.bf16.gmra.mxu0 %v1064
        %v1705 = vpop.f32.mrf.mxu0
        %v1706 = vadd.f32 %v1537, %v1705
        %v1707 = vpop.f32.mrf.mxu0
        %v1708 = vadd.f32 %v1539, %v1707
        %1709 = vmatmul.bf16.gmra.mxu0 %v1068
        %v1710 = vpop.f32.mrf.mxu0
        %v1711 = vadd.f32 %v1542, %v1710
        %v1712 = vpop.f32.mrf.mxu0
        %v1713 = vadd.f32 %v1544, %v1712
        %1714 = vmatmul.bf16.gmra.mxu0 %v1072
        %v1715 = vpop.f32.mrf.mxu0
        %v1716 = vadd.f32 %v1547, %v1715
        %v1717 = vpop.f32.mrf.mxu0
        %v1718 = vadd.f32 %v1549, %v1717
        %1719 = vmatmul.bf16.gmra.mxu0 %v1076
        %v1720 = vpop.f32.mrf.mxu0
        %v1721 = vadd.f32 %v1552, %v1720
        %v1722 = vpop.f32.mrf.mxu0
        %v1723 = vadd.f32 %v1554, %v1722
        %1724 = vmatmul.bf16.gmra.mxu0 %v1080
        %v1725 = vpop.f32.mrf.mxu0
        %v1726 = vadd.f32 %v1557, %v1725
        %v1727 = vpop.f32.mrf.mxu0
        %v1728 = vadd.f32 %v1559, %v1727
        %1729 = vmatmul.bf16.gmra.mxu0 %v1084
        %v1730 = vpop.f32.mrf.mxu0
        %v1731 = vadd.f32 %v1562, %v1730
        %v1732 = vpop.f32.mrf.mxu0
        %v1733 = vadd.f32 %v1564, %v1732
        %1734 = vmatmul.bf16.gmra.mxu0 %v1088
        %v1735 = vpop.f32.mrf.mxu0
        %v1736 = vadd.f32 %v1567, %v1735
        %v1737 = vpop.f32.mrf.mxu0
        %v1738 = vadd.f32 %v1569, %v1737
        %1739 = vmatmul.bf16.gmra.mxu0 %v1092
        %v1740 = vpop.f32.mrf.mxu0
        %v1741 = vadd.f32 %v1572, %v1740
        %v1742 = vpop.f32.mrf.mxu0
        %v1743 = vadd.f32 %v1574, %v1742
        %1744 = vmatmul.bf16.gmra.mxu0 %v1096
        %v1745 = vpop.f32.mrf.mxu0
        %v1746 = vadd.f32 %v1577, %v1745
        %v1747 = vpop.f32.mrf.mxu0
        %v1748 = vadd.f32 %v1579, %v1747
        %1749 = vmatmul.bf16.gmra.mxu0 %v1100
        %v1750 = vpop.f32.mrf.mxu0
        %v1751 = vadd.f32 %v1582, %v1750
        %v1752 = vpop.f32.mrf.mxu0
        %v1753 = vadd.f32 %v1584, %v1752
        %1754 = vmatmul.bf16.gmra.mxu0 %v1104
        %v1755 = vpop.f32.mrf.mxu0
        %v1756 = vadd.f32 %v1587, %v1755
        %v1757 = vpop.f32.mrf.mxu0
        %v1758 = vadd.f32 %v1589, %v1757
        %1759 = vmatmul.bf16.gmra.mxu0 %v1108
        %v1760 = vpop.f32.mrf.mxu0
        %v1761 = vadd.f32 %v1592, %v1760
        %v1762 = vpop.f32.mrf.mxu0
        %v1763 = vadd.f32 %v1594, %v1762
        %1764 = vmatmul.bf16.gmra.mxu0 %v1112
        %v1765 = vpop.f32.mrf.mxu0
        %v1766 = vadd.f32 %v1597, %v1765
        %v1767 = vpop.f32.mrf.mxu0
        %v1768 = vadd.f32 %v1599, %v1767
        %1769 = vmatmul.bf16.gmra.mxu0 %v1116
        %v1770 = vpop.f32.mrf.mxu0
        %v1771 = vadd.f32 %v1602, %v1770
        %v1772 = vpop.f32.mrf.mxu0
        %v1773 = vadd.f32 %v1604, %v1772
        %1774 = vmatmul.bf16.gmra.mxu0 %v1120
        %v1775 = vpop.f32.mrf.mxu0
        %v1776 = vadd.f32 %v1607, %v1775
        %v1777 = vpop.f32.mrf.mxu0
        %v1778 = vadd.f32 %v1609, %v1777
        %1779 = vmatmul.bf16.gmra.mxu0 %v1124
        %v1780 = vpop.f32.mrf.mxu0
        %v1781 = vadd.f32 %v1612, %v1780
        %v1782 = vpop.f32.mrf.mxu0
        %v1783 = vadd.f32 %v1614, %v1782
        %1784 = vdwg.mxu0
        %1785 = vmatpush.bf16.msra.mxu0 %v1406
        %1786 = vmatpush.bf16.msra.mxu0 %v1405
        %1787 = vmatpush.bf16.msra.mxu0 %v1404
        %1788 = vmatpush.bf16.msra.mxu0 %v1403
        %1789 = vmatpush.bf16.msra.mxu0 %v1402
        %1790 = vmatpush.bf16.msra.mxu0 %v1401
        %1791 = vmatpush.bf16.msra.mxu0 %v1400
        %1792 = vmatpush.bf16.msra.mxu0 %v1399
        %1793 = vmatmul.bf16.gmra.mxu0 %v1001
        %v1794 = vpop.f32.mrf.mxu0
        %v1795 = vadd.f32 %v1626, %v1794
        %v1796 = vpop.f32.mrf.mxu0
        %v1797 = vadd.f32 %v1628, %v1796
        %1798 = vmatmul.bf16.gmra.mxu0 %v1005
        %v1799 = vpop.f32.mrf.mxu0
        %v1800 = vadd.f32 %v1631, %v1799
        %v1801 = vpop.f32.mrf.mxu0
        %v1802 = vadd.f32 %v1633, %v1801
        %1803 = vmatmul.bf16.gmra.mxu0 %v1009
        %v1804 = vpop.f32.mrf.mxu0
        %v1805 = vadd.f32 %v1636, %v1804
        %v1806 = vpop.f32.mrf.mxu0
        %v1807 = vadd.f32 %v1638, %v1806
        %1808 = vmatmul.bf16.gmra.mxu0 %v1013
        %v1809 = vpop.f32.mrf.mxu0
        %v1810 = vadd.f32 %v1641, %v1809
        %v1811 = vpop.f32.mrf.mxu0
        %v1812 = vadd.f32 %v1643, %v1811
        %1813 = vmatmul.bf16.gmra.mxu0 %v1017
        %v1814 = vpop.f32.mrf.mxu0
        %v1815 = vadd.f32 %v1646, %v1814
        %v1816 = vpop.f32.mrf.mxu0
        %v1817 = vadd.f32 %v1648, %v1816
        %1818 = vmatmul.bf16.gmra.mxu0 %v1021
        %v1819 = vpop.f32.mrf.mxu0
        %v1820 = vadd.f32 %v1651, %v1819
        %v1821 = vpop.f32.mrf.mxu0
        %v1822 = vadd.f32 %v1653, %v1821
        %1823 = vmatmul.bf16.gmra.mxu0 %v1025
        %v1824 = vpop.f32.mrf.mxu0
        %v1825 = vadd.f32 %v1656, %v1824
        %v1826 = vpop.f32.mrf.mxu0
        %v1827 = vadd.f32 %v1658, %v1826
        %1828 = vmatmul.bf16.gmra.mxu0 %v1029
        %v1829 = vpop.f32.mrf.mxu0
        %v1830 = vadd.f32 %v1661, %v1829
        %v1831 = vpop.f32.mrf.mxu0
        %v1832 = vadd.f32 %v1663, %v1831
        %1833 = vmatmul.bf16.gmra.mxu0 %v1033
        %v1834 = vpop.f32.mrf.mxu0
        %v1835 = vadd.f32 %v1666, %v1834
        %v1836 = vpop.f32.mrf.mxu0
        %v1837 = vadd.f32 %v1668, %v1836
        %1838 = vmatmul.bf16.gmra.mxu0 %v1037
        %v1839 = vpop.f32.mrf.mxu0
        %v1840 = vadd.f32 %v1671, %v1839
        %v1841 = vpop.f32.mrf.mxu0
        %v1842 = vadd.f32 %v1673, %v1841
        %1843 = vmatmul.bf16.gmra.mxu0 %v1041
        %v1844 = vpop.f32.mrf.mxu0
        %v1845 = vadd.f32 %v1676, %v1844
        %v1846 = vpop.f32.mrf.mxu0
        %v1847 = vadd.f32 %v1678, %v1846
        %1848 = vmatmul.bf16.gmra.mxu0 %v1045
        %v1849 = vpop.f32.mrf.mxu0
        %v1850 = vadd.f32 %v1681, %v1849
        %v1851 = vpop.f32.mrf.mxu0
        %v1852 = vadd.f32 %v1683, %v1851
        %1853 = vmatmul.bf16.gmra.mxu0 %v1049
        %v1854 = vpop.f32.mrf.mxu0
        %v1855 = vadd.f32 %v1686, %v1854
        %v1856 = vpop.f32.mrf.mxu0
        %v1857 = vadd.f32 %v1688, %v1856
        %1858 = vmatmul.bf16.gmra.mxu0 %v1053
        %v1859 = vpop.f32.mrf.mxu0
        %v1860 = vadd.f32 %v1691, %v1859
        %v1861 = vpop.f32.mrf.mxu0
        %v1862 = vadd.f32 %v1693, %v1861
        %1863 = vmatmul.bf16.gmra.mxu0 %v1057
        %v1864 = vpop.f32.mrf.mxu0
        %v1865 = vadd.f32 %v1696, %v1864
        %v1866 = vpop.f32.mrf.mxu0
        %v1867 = vadd.f32 %v1698, %v1866
        %1868 = vmatmul.bf16.gmra.mxu0 %v1061
        %v1869 = vpop.f32.mrf.mxu0
        %v1870 = vadd.f32 %v1701, %v1869
        %v1871 = vpop.f32.mrf.mxu0
        %v1872 = vadd.f32 %v1703, %v1871
        %1873 = vmatmul.bf16.gmra.mxu0 %v1065
        %v1874 = vpop.f32.mrf.mxu0
        %v1875 = vadd.f32 %v1706, %v1874
        %v1876 = vpop.f32.mrf.mxu0
        %v1877 = vadd.f32 %v1708, %v1876
        %1878 = vmatmul.bf16.gmra.mxu0 %v1069
        %v1879 = vpop.f32.mrf.mxu0
        %v1880 = vadd.f32 %v1711, %v1879
        %v1881 = vpop.f32.mrf.mxu0
        %v1882 = vadd.f32 %v1713, %v1881
        %1883 = vmatmul.bf16.gmra.mxu0 %v1073
        %v1884 = vpop.f32.mrf.mxu0
        %v1885 = vadd.f32 %v1716, %v1884
        %v1886 = vpop.f32.mrf.mxu0
        %v1887 = vadd.f32 %v1718, %v1886
        %1888 = vmatmul.bf16.gmra.mxu0 %v1077
        %v1889 = vpop.f32.mrf.mxu0
        %v1890 = vadd.f32 %v1721, %v1889
        %v1891 = vpop.f32.mrf.mxu0
        %v1892 = vadd.f32 %v1723, %v1891
        %1893 = vmatmul.bf16.gmra.mxu0 %v1081
        %v1894 = vpop.f32.mrf.mxu0
        %v1895 = vadd.f32 %v1726, %v1894
        %v1896 = vpop.f32.mrf.mxu0
        %v1897 = vadd.f32 %v1728, %v1896
        %1898 = vmatmul.bf16.gmra.mxu0 %v1085
        %v1899 = vpop.f32.mrf.mxu0
        %v1900 = vadd.f32 %v1731, %v1899
        %v1901 = vpop.f32.mrf.mxu0
        %v1902 = vadd.f32 %v1733, %v1901
        %1903 = vmatmul.bf16.gmra.mxu0 %v1089
        %v1904 = vpop.f32.mrf.mxu0
        %v1905 = vadd.f32 %v1736, %v1904
        %v1906 = vpop.f32.mrf.mxu0
        %v1907 = vadd.f32 %v1738, %v1906
        %1908 = vmatmul.bf16.gmra.mxu0 %v1093
        %v1909 = vpop.f32.mrf.mxu0
        %v1910 = vadd.f32 %v1741, %v1909
        %v1911 = vpop.f32.mrf.mxu0
        %v1912 = vadd.f32 %v1743, %v1911
        %1913 = vmatmul.bf16.gmra.mxu0 %v1097
        %v1914 = vpop.f32.mrf.mxu0
        %v1915 = vadd.f32 %v1746, %v1914
        %v1916 = vpop.f32.mrf.mxu0
        %v1917 = vadd.f32 %v1748, %v1916
        %1918 = vmatmul.bf16.gmra.mxu0 %v1101
        %v1919 = vpop.f32.mrf.mxu0
        %v1920 = vadd.f32 %v1751, %v1919
        %v1921 = vpop.f32.mrf.mxu0
        %v1922 = vadd.f32 %v1753, %v1921
        %1923 = vmatmul.bf16.gmra.mxu0 %v1105
        %v1924 = vpop.f32.mrf.mxu0
        %v1925 = vadd.f32 %v1756, %v1924
        %v1926 = vpop.f32.mrf.mxu0
        %v1927 = vadd.f32 %v1758, %v1926
        %1928 = vmatmul.bf16.gmra.mxu0 %v1109
        %v1929 = vpop.f32.mrf.mxu0
        %v1930 = vadd.f32 %v1761, %v1929
        %v1931 = vpop.f32.mrf.mxu0
        %v1932 = vadd.f32 %v1763, %v1931
        %1933 = vmatmul.bf16.gmra.mxu0 %v1113
        %v1934 = vpop.f32.mrf.mxu0
        %v1935 = vadd.f32 %v1766, %v1934
        %v1936 = vpop.f32.mrf.mxu0
        %v1937 = vadd.f32 %v1768, %v1936
        %1938 = vmatmul.bf16.gmra.mxu0 %v1117
        %v1939 = vpop.f32.mrf.mxu0
        %v1940 = vadd.f32 %v1771, %v1939
        %v1941 = vpop.f32.mrf.mxu0
        %v1942 = vadd.f32 %v1773, %v1941
        %1943 = vmatmul.bf16.gmra.mxu0 %v1121
        %v1944 = vpop.f32.mrf.mxu0
        %v1945 = vadd.f32 %v1776, %v1944
        %v1946 = vpop.f32.mrf.mxu0
        %v1947 = vadd.f32 %v1778, %v1946
        %1948 = vmatmul.bf16.gmra.mxu0 %v1125
        %v1949 = vpop.f32.mrf.mxu0
        %v1950 = vadd.f32 %v1781, %v1949
        %v1951 = vpop.f32.mrf.mxu0
        %v1952 = vadd.f32 %v1783, %v1951
        %1953 = vdwg.mxu0
        %1954 = vmatpush.bf16.msra.mxu0 %v1414
        %1955 = vmatpush.bf16.msra.mxu0 %v1413
        %1956 = vmatpush.bf16.msra.mxu0 %v1412
        %1957 = vmatpush.bf16.msra.mxu0 %v1411
        %1958 = vmatpush.bf16.msra.mxu0 %v1410
        %1959 = vmatpush.bf16.msra.mxu0 %v1409
        %1960 = vmatpush.bf16.msra.mxu0 %v1408
        %1961 = vmatpush.bf16.msra.mxu0 %v1407
        %1962 = vmatmul.bf16.gmra.mxu0 %v1002
        %v1963 = vpop.f32.mrf.mxu0
        %v1964 = vadd.f32 %v1795, %v1963
        %v1965 = vpop.f32.mrf.mxu0
        %v1966 = vadd.f32 %v1797, %v1965
        %1967 = vmatmul.bf16.gmra.mxu0 %v1006
        %v1968 = vpop.f32.mrf.mxu0
        %v1969 = vadd.f32 %v1800, %v1968
        %v1970 = vpop.f32.mrf.mxu0
        %v1971 = vadd.f32 %v1802, %v1970
        %1972 = vmatmul.bf16.gmra.mxu0 %v1010
        %v1973 = vpop.f32.mrf.mxu0
        %v1974 = vadd.f32 %v1805, %v1973
        %v1975 = vpop.f32.mrf.mxu0
        %v1976 = vadd.f32 %v1807, %v1975
        %1977 = vmatmul.bf16.gmra.mxu0 %v1014
        %v1978 = vpop.f32.mrf.mxu0
        %v1979 = vadd.f32 %v1810, %v1978
        %v1980 = vpop.f32.mrf.mxu0
        %v1981 = vadd.f32 %v1812, %v1980
        %1982 = vmatmul.bf16.gmra.mxu0 %v1018
        %v1983 = vpop.f32.mrf.mxu0
        %v1984 = vadd.f32 %v1815, %v1983
        %v1985 = vpop.f32.mrf.mxu0
        %v1986 = vadd.f32 %v1817, %v1985
        %1987 = vmatmul.bf16.gmra.mxu0 %v1022
        %v1988 = vpop.f32.mrf.mxu0
        %v1989 = vadd.f32 %v1820, %v1988
        %v1990 = vpop.f32.mrf.mxu0
        %v1991 = vadd.f32 %v1822, %v1990
        %1992 = vmatmul.bf16.gmra.mxu0 %v1026
        %v1993 = vpop.f32.mrf.mxu0
        %v1994 = vadd.f32 %v1825, %v1993
        %v1995 = vpop.f32.mrf.mxu0
        %v1996 = vadd.f32 %v1827, %v1995
        %1997 = vmatmul.bf16.gmra.mxu0 %v1030
        %v1998 = vpop.f32.mrf.mxu0
        %v1999 = vadd.f32 %v1830, %v1998
        %v2000 = vpop.f32.mrf.mxu0
        %v2001 = vadd.f32 %v1832, %v2000
        %2002 = vmatmul.bf16.gmra.mxu0 %v1034
        %v2003 = vpop.f32.mrf.mxu0
        %v2004 = vadd.f32 %v1835, %v2003
        %v2005 = vpop.f32.mrf.mxu0
        %v2006 = vadd.f32 %v1837, %v2005
        %2007 = vmatmul.bf16.gmra.mxu0 %v1038
        %v2008 = vpop.f32.mrf.mxu0
        %v2009 = vadd.f32 %v1840, %v2008
        %v2010 = vpop.f32.mrf.mxu0
        %v2011 = vadd.f32 %v1842, %v2010
        %2012 = vmatmul.bf16.gmra.mxu0 %v1042
        %v2013 = vpop.f32.mrf.mxu0
        %v2014 = vadd.f32 %v1845, %v2013
        %v2015 = vpop.f32.mrf.mxu0
        %v2016 = vadd.f32 %v1847, %v2015
        %2017 = vmatmul.bf16.gmra.mxu0 %v1046
        %v2018 = vpop.f32.mrf.mxu0
        %v2019 = vadd.f32 %v1850, %v2018
        %v2020 = vpop.f32.mrf.mxu0
        %v2021 = vadd.f32 %v1852, %v2020
        %2022 = vmatmul.bf16.gmra.mxu0 %v1050
        %v2023 = vpop.f32.mrf.mxu0
        %v2024 = vadd.f32 %v1855, %v2023
        %v2025 = vpop.f32.mrf.mxu0
        %v2026 = vadd.f32 %v1857, %v2025
        %2027 = vmatmul.bf16.gmra.mxu0 %v1054
        %v2028 = vpop.f32.mrf.mxu0
        %v2029 = vadd.f32 %v1860, %v2028
        %v2030 = vpop.f32.mrf.mxu0
        %v2031 = vadd.f32 %v1862, %v2030
        %2032 = vmatmul.bf16.gmra.mxu0 %v1058
        %v2033 = vpop.f32.mrf.mxu0
        %v2034 = vadd.f32 %v1865, %v2033
        %v2035 = vpop.f32.mrf.mxu0
        %v2036 = vadd.f32 %v1867, %v2035
        %2037 = vmatmul.bf16.gmra.mxu0 %v1062
        %v2038 = vpop.f32.mrf.mxu0
        %v2039 = vadd.f32 %v1870, %v2038
        %v2040 = vpop.f32.mrf.mxu0
        %v2041 = vadd.f32 %v1872, %v2040
        %2042 = vmatmul.bf16.gmra.mxu0 %v1066
        %v2043 = vpop.f32.mrf.mxu0
        %v2044 = vadd.f32 %v1875, %v2043
        %v2045 = vpop.f32.mrf.mxu0
        %v2046 = vadd.f32 %v1877, %v2045
        %2047 = vmatmul.bf16.gmra.mxu0 %v1070
        %v2048 = vpop.f32.mrf.mxu0
        %v2049 = vadd.f32 %v1880, %v2048
        %v2050 = vpop.f32.mrf.mxu0
        %v2051 = vadd.f32 %v1882, %v2050
        %2052 = vmatmul.bf16.gmra.mxu0 %v1074
        %v2053 = vpop.f32.mrf.mxu0
        %v2054 = vadd.f32 %v1885, %v2053
        %v2055 = vpop.f32.mrf.mxu0
        %v2056 = vadd.f32 %v1887, %v2055
        %2057 = vmatmul.bf16.gmra.mxu0 %v1078
        %v2058 = vpop.f32.mrf.mxu0
        %v2059 = vadd.f32 %v1890, %v2058
        %v2060 = vpop.f32.mrf.mxu0
        %v2061 = vadd.f32 %v1892, %v2060
        %2062 = vmatmul.bf16.gmra.mxu0 %v1082
        %v2063 = vpop.f32.mrf.mxu0
        %v2064 = vadd.f32 %v1895, %v2063
        %v2065 = vpop.f32.mrf.mxu0
        %v2066 = vadd.f32 %v1897, %v2065
        %2067 = vmatmul.bf16.gmra.mxu0 %v1086
        %v2068 = vpop.f32.mrf.mxu0
        %v2069 = vadd.f32 %v1900, %v2068
        %v2070 = vpop.f32.mrf.mxu0
        %v2071 = vadd.f32 %v1902, %v2070
        %2072 = vmatmul.bf16.gmra.mxu0 %v1090
        %v2073 = vpop.f32.mrf.mxu0
        %v2074 = vadd.f32 %v1905, %v2073
        %v2075 = vpop.f32.mrf.mxu0
        %v2076 = vadd.f32 %v1907, %v2075
        %2077 = vmatmul.bf16.gmra.mxu0 %v1094
        %v2078 = vpop.f32.mrf.mxu0
        %v2079 = vadd.f32 %v1910, %v2078
        %v2080 = vpop.f32.mrf.mxu0
        %v2081 = vadd.f32 %v1912, %v2080
        %2082 = vmatmul.bf16.gmra.mxu0 %v1098
        %v2083 = vpop.f32.mrf.mxu0
        %v2084 = vadd.f32 %v1915, %v2083
        %v2085 = vpop.f32.mrf.mxu0
        %v2086 = vadd.f32 %v1917, %v2085
        %2087 = vmatmul.bf16.gmra.mxu0 %v1102
        %v2088 = vpop.f32.mrf.mxu0
        %v2089 = vadd.f32 %v1920, %v2088
        %v2090 = vpop.f32.mrf.mxu0
        %v2091 = vadd.f32 %v1922, %v2090
        %2092 = vmatmul.bf16.gmra.mxu0 %v1106
        %v2093 = vpop.f32.mrf.mxu0
        %v2094 = vadd.f32 %v1925, %v2093
        %v2095 = vpop.f32.mrf.mxu0
        %v2096 = vadd.f32 %v1927, %v2095
        %2097 = vmatmul.bf16.gmra.mxu0 %v1110
        %v2098 = vpop.f32.mrf.mxu0
        %v2099 = vadd.f32 %v1930, %v2098
        %v2100 = vpop.f32.mrf.mxu0
        %v2101 = vadd.f32 %v1932, %v2100
        %2102 = vmatmul.bf16.gmra.mxu0 %v1114
        %v2103 = vpop.f32.mrf.mxu0
        %v2104 = vadd.f32 %v1935, %v2103
        %v2105 = vpop.f32.mrf.mxu0
        %v2106 = vadd.f32 %v1937, %v2105
        %2107 = vmatmul.bf16.gmra.mxu0 %v1118
        %v2108 = vpop.f32.mrf.mxu0
        %v2109 = vadd.f32 %v1940, %v2108
        %v2110 = vpop.f32.mrf.mxu0
        %v2111 = vadd.f32 %v1942, %v2110
        %2112 = vmatmul.bf16.gmra.mxu0 %v1122
        %v2113 = vpop.f32.mrf.mxu0
        %v2114 = vadd.f32 %v1945, %v2113
        %v2115 = vpop.f32.mrf.mxu0
        %v2116 = vadd.f32 %v1947, %v2115
        %2117 = vmatmul.bf16.gmra.mxu0 %v1126
        %v2118 = vpop.f32.mrf.mxu0
        %v2119 = vadd.f32 %v1950, %v2118
        %v2120 = vpop.f32.mrf.mxu0
        %v2121 = vadd.f32 %v1952, %v2120
        %2122 = vdwg.mxu0
        %v2123 = vadd.f32 %v423, %v1964
        %v2124 = vadd.f32 %v424, %v1966
        %v2125 = vadd.f32 %v425, %v1969
        %v2126 = vadd.f32 %v426, %v1971
        %v2127 = vadd.f32 %v427, %v1974
        %v2128 = vadd.f32 %v428, %v1976
        %v2129 = vadd.f32 %v429, %v1979
        %v2130 = vadd.f32 %v430, %v1981
        %v2131 = vadd.f32 %v431, %v1984
        %v2132 = vadd.f32 %v432, %v1986
        %v2133 = vadd.f32 %v433, %v1989
        %v2134 = vadd.f32 %v434, %v1991
        %v2135 = vadd.f32 %v435, %v1994
        %v2136 = vadd.f32 %v436, %v1996
        %v2137 = vadd.f32 %v437, %v1999
        %v2138 = vadd.f32 %v438, %v2001
        %v2139 = vadd.f32 %v439, %v2004
        %v2140 = vadd.f32 %v440, %v2006
        %v2141 = vadd.f32 %v441, %v2009
        %v2142 = vadd.f32 %v442, %v2011
        %v2143 = vadd.f32 %v443, %v2014
        %v2144 = vadd.f32 %v444, %v2016
        %v2145 = vadd.f32 %v445, %v2019
        %v2146 = vadd.f32 %v446, %v2021
        %v2147 = vadd.f32 %v447, %v2024
        %v2148 = vadd.f32 %v448, %v2026
        %v2149 = vadd.f32 %v449, %v2029
        %v2150 = vadd.f32 %v450, %v2031
        %v2151 = vadd.f32 %v451, %v2034
        %v2152 = vadd.f32 %v452, %v2036
        %v2153 = vadd.f32 %v453, %v2039
        %v2154 = vadd.f32 %v454, %v2041
        %v2155 = vadd.f32 %v455, %v2044
        %v2156 = vadd.f32 %v456, %v2046
        %v2157 = vadd.f32 %v457, %v2049
        %v2158 = vadd.f32 %v458, %v2051
        %v2159 = vadd.f32 %v459, %v2054
        %v2160 = vadd.f32 %v460, %v2056
        %v2161 = vadd.f32 %v461, %v2059
        %v2162 = vadd.f32 %v462, %v2061
        %v2163 = vadd.f32 %v463, %v2064
        %v2164 = vadd.f32 %v464, %v2066
        %v2165 = vadd.f32 %v465, %v2069
        %v2166 = vadd.f32 %v466, %v2071
        %v2167 = vadd.f32 %v467, %v2074
        %v2168 = vadd.f32 %v468, %v2076
        %v2169 = vadd.f32 %v469, %v2079
        %v2170 = vadd.f32 %v470, %v2081
        %v2171 = vadd.f32 %v471, %v2084
        %v2172 = vadd.f32 %v472, %v2086
        %v2173 = vadd.f32 %v473, %v2089
        %v2174 = vadd.f32 %v474, %v2091
        %v2175 = vadd.f32 %v475, %v2094
        %v2176 = vadd.f32 %v476, %v2096
        %v2177 = vadd.f32 %v477, %v2099
        %v2178 = vadd.f32 %v478, %v2101
        %v2179 = vadd.f32 %v479, %v2104
        %v2180 = vadd.f32 %v480, %v2106
        %v2181 = vadd.f32 %v481, %v2109
        %v2182 = vadd.f32 %v482, %v2111
        %v2183 = vadd.f32 %v483, %v2114
        %v2184 = vadd.f32 %v484, %v2116
        %v2185 = vadd.f32 %v485, %v2119
        %v2186 = vadd.f32 %v486, %v2121
        %2187 = vst [vmem:[#allocation2] sm:$0xff] %v2123
        %2188 = vst [vmem:[#allocation2 + $0x8] sm:$0xff] %v2124
        %2189 = vst [vmem:[#allocation2 + $0x10] sm:$0xff] %v2125
        %2190 = vst [vmem:[#allocation2 + $0x18] sm:$0xff] %v2126
        %2191 = vst [vmem:[#allocation2 + $0x20] sm:$0xff] %v2127
        %2192 = vst [vmem:[#allocation2 + $0x28] sm:$0xff] %v2128
        %2193 = vst [vmem:[#allocation2 + $0x30] sm:$0xff] %v2129
        %2194 = vst [vmem:[#allocation2 + $0x38] sm:$0xff] %v2130
        %2195 = vst [vmem:[#allocation2 + $0x40] sm:$0xff] %v2131
        %2196 = vst [vmem:[#allocation2 + $0x48] sm:$0xff] %v2132
        %2197 = vst [vmem:[#allocation2 + $0x50] sm:$0xff] %v2133
        %2198 = vst [vmem:[#allocation2 + $0x58] sm:$0xff] %v2134
        %2199 = vst [vmem:[#allocation2 + $0x60] sm:$0xff] %v2135
        %2200 = vst [vmem:[#allocation2 + $0x68] sm:$0xff] %v2136
        %2201 = vst [vmem:[#allocation2 + $0x70] sm:$0xff] %v2137
        %2202 = vst [vmem:[#allocation2 + $0x78] sm:$0xff] %v2138
        %2203 = vst [vmem:[#allocation2 + $0x80] sm:$0xff] %v2139
        %2204 = vst [vmem:[#allocation2 + $0x88] sm:$0xff] %v2140
        %2205 = vst [vmem:[#allocation2 + $0x90] sm:$0xff] %v2141
        %2206 = vst [vmem:[#allocation2 + $0x98] sm:$0xff] %v2142
        %2207 = vst [vmem:[#allocation2 + $0xa0] sm:$0xff] %v2143
        %2208 = vst [vmem:[#allocation2 + $0xa8] sm:$0xff] %v2144
        %2209 = vst [vmem:[#allocation2 + $0xb0] sm:$0xff] %v2145
        %2210 = vst [vmem:[#allocation2 + $0xb8] sm:$0xff] %v2146
        %2211 = vst [vmem:[#allocation2 + $0xc0] sm:$0xff] %v2147
        %2212 = vst [vmem:[#allocation2 + $0xc8] sm:$0xff] %v2148
        %2213 = vst [vmem:[#allocation2 + $0xd0] sm:$0xff] %v2149
        %2214 = vst [vmem:[#allocation2 + $0xd8] sm:$0xff] %v2150
        %2215 = vst [vmem:[#allocation2 + $0xe0] sm:$0xff] %v2151
        %2216 = vst [vmem:[#allocation2 + $0xe8] sm:$0xff] %v2152
        %2217 = vst [vmem:[#allocation2 + $0xf0] sm:$0xff] %v2153
        %2218 = vst [vmem:[#allocation2 + $0xf8] sm:$0xff] %v2154
        %2219 = vst [vmem:[#allocation2 + $0x100] sm:$0xff] %v2155
        %2220 = vst [vmem:[#allocation2 + $0x108] sm:$0xff] %v2156
        %2221 = vst [vmem:[#allocation2 + $0x110] sm:$0xff] %v2157
        %2222 = vst [vmem:[#allocation2 + $0x118] sm:$0xff] %v2158
        %2223 = vst [vmem:[#allocation2 + $0x120] sm:$0xff] %v2159
        %2224 = vst [vmem:[#allocation2 + $0x128] sm:$0xff] %v2160
        %2225 = vst [vmem:[#allocation2 + $0x130] sm:$0xff] %v2161
        %2226 = vst [vmem:[#allocation2 + $0x138] sm:$0xff] %v2162
        %2227 = vst [vmem:[#allocation2 + $0x140] sm:$0xff] %v2163
        %2228 = vst [vmem:[#allocation2 + $0x148] sm:$0xff] %v2164
        %2229 = vst [vmem:[#allocation2 + $0x150] sm:$0xff] %v2165
        %2230 = vst [vmem:[#allocation2 + $0x158] sm:$0xff] %v2166
        %2231 = vst [vmem:[#allocation2 + $0x160] sm:$0xff] %v2167
        %2232 = vst [vmem:[#allocation2 + $0x168] sm:$0xff] %v2168
        %2233 = vst [vmem:[#allocation2 + $0x170] sm:$0xff] %v2169
        %2234 = vst [vmem:[#allocation2 + $0x178] sm:$0xff] %v2170
        %2235 = vst [vmem:[#allocation2 + $0x180] sm:$0xff] %v2171
        %2236 = vst [vmem:[#allocation2 + $0x188] sm:$0xff] %v2172
        %2237 = vst [vmem:[#allocation2 + $0x190] sm:$0xff] %v2173
        %2238 = vst [vmem:[#allocation2 + $0x198] sm:$0xff] %v2174
        %2239 = vst [vmem:[#allocation2 + $0x1a0] sm:$0xff] %v2175
        %2240 = vst [vmem:[#allocation2 + $0x1a8] sm:$0xff] %v2176
        %2241 = vst [vmem:[#allocation2 + $0x1b0] sm:$0xff] %v2177
        %2242 = vst [vmem:[#allocation2 + $0x1b8] sm:$0xff] %v2178
        %2243 = vst [vmem:[#allocation2 + $0x1c0] sm:$0xff] %v2179
        %2244 = vst [vmem:[#allocation2 + $0x1c8] sm:$0xff] %v2180
        %2245 = vst [vmem:[#allocation2 + $0x1d0] sm:$0xff] %v2181
        %2246 = vst [vmem:[#allocation2 + $0x1d8] sm:$0xff] %v2182
        %2247 = vst [vmem:[#allocation2 + $0x1e0] sm:$0xff] %v2183
        %2248 = vst [vmem:[#allocation2 + $0x1e8] sm:$0xff] %v2184
        %2249 = vst [vmem:[#allocation2 + $0x1f0] sm:$0xff] %v2185
        %2250 = vst [vmem:[#allocation2 + $0x1f8] sm:$0xff] %v2186
        %p2251 = scmp.eq.s32.totalorder %s28, 1
        // Predicated region
        $region57: #{tpu_custom_call.1} parent=35 // pred_check
          %p2252 = pneg %p2251
        $region58: #{tpu_custom_call.1} parent=35 // pred_check_branch
          %2254 = sbr.rel (%p2252) target = $region60
        $region59: #{tpu_custom_call.1} parent=35 // pred_region
          %v2255 = vld [vmem:[#allocation2] sm:$0xff]
          %v2256 = vld [vmem:[#allocation2 + $0x8] sm:$0xff]
          %v2257 = vld [vmem:[#allocation2 + $0x10] sm:$0xff]
          %v2258 = vld [vmem:[#allocation2 + $0x18] sm:$0xff]
          %v2259 = vld [vmem:[#allocation2 + $0x20] sm:$0xff]
          %v2260 = vld [vmem:[#allocation2 + $0x28] sm:$0xff]
          %v2261 = vld [vmem:[#allocation2 + $0x30] sm:$0xff]
          %v2262 = vld [vmem:[#allocation2 + $0x38] sm:$0xff]
          %v2263 = vld [vmem:[#allocation2 + $0x40] sm:$0xff]
          %v2264 = vld [vmem:[#allocation2 + $0x48] sm:$0xff]
          %v2265 = vld [vmem:[#allocation2 + $0x50] sm:$0xff]
          %v2266 = vld [vmem:[#allocation2 + $0x58] sm:$0xff]
          %v2267 = vld [vmem:[#allocation2 + $0x60] sm:$0xff]
          %v2268 = vld [vmem:[#allocation2 + $0x68] sm:$0xff]
          %v2269 = vld [vmem:[#allocation2 + $0x70] sm:$0xff]
          %v2270 = vld [vmem:[#allocation2 + $0x78] sm:$0xff]
          %v2271 = vld [vmem:[#allocation2 + $0x80] sm:$0xff]
          %v2272 = vld [vmem:[#allocation2 + $0x88] sm:$0xff]
          %v2273 = vld [vmem:[#allocation2 + $0x90] sm:$0xff]
          %v2274 = vld [vmem:[#allocation2 + $0x98] sm:$0xff]
          %v2275 = vld [vmem:[#allocation2 + $0xa0] sm:$0xff]
          %v2276 = vld [vmem:[#allocation2 + $0xa8] sm:$0xff]
          %v2277 = vld [vmem:[#allocation2 + $0xb0] sm:$0xff]
          %v2278 = vld [vmem:[#allocation2 + $0xb8] sm:$0xff]
          %v2279 = vld [vmem:[#allocation2 + $0xc0] sm:$0xff]
          %v2280 = vld [vmem:[#allocation2 + $0xc8] sm:$0xff]
          %v2281 = vld [vmem:[#allocation2 + $0xd0] sm:$0xff]
          %v2282 = vld [vmem:[#allocation2 + $0xd8] sm:$0xff]
          %v2283 = vld [vmem:[#allocation2 + $0xe0] sm:$0xff]
          %v2284 = vld [vmem:[#allocation2 + $0xe8] sm:$0xff]
          %v2285 = vld [vmem:[#allocation2 + $0xf0] sm:$0xff]
          %v2286 = vld [vmem:[#allocation2 + $0xf8] sm:$0xff]
          %v2287 = vld [vmem:[#allocation2 + $0x100] sm:$0xff]
          %v2288 = vld [vmem:[#allocation2 + $0x108] sm:$0xff]
          %v2289 = vld [vmem:[#allocation2 + $0x110] sm:$0xff]
          %v2290 = vld [vmem:[#allocation2 + $0x118] sm:$0xff]
          %v2291 = vld [vmem:[#allocation2 + $0x120] sm:$0xff]
          %v2292 = vld [vmem:[#allocation2 + $0x128] sm:$0xff]
          %v2293 = vld [vmem:[#allocation2 + $0x130] sm:$0xff]
          %v2294 = vld [vmem:[#allocation2 + $0x138] sm:$0xff]
          %v2295 = vld [vmem:[#allocation2 + $0x140] sm:$0xff]
          %v2296 = vld [vmem:[#allocation2 + $0x148] sm:$0xff]
          %v2297 = vld [vmem:[#allocation2 + $0x150] sm:$0xff]
          %v2298 = vld [vmem:[#allocation2 + $0x158] sm:$0xff]
          %v2299 = vld [vmem:[#allocation2 + $0x160] sm:$0xff]
          %v2300 = vld [vmem:[#allocation2 + $0x168] sm:$0xff]
          %v2301 = vld [vmem:[#allocation2 + $0x170] sm:$0xff]
          %v2302 = vld [vmem:[#allocation2 + $0x178] sm:$0xff]
          %v2303 = vld [vmem:[#allocation2 + $0x180] sm:$0xff]
          %v2304 = vld [vmem:[#allocation2 + $0x188] sm:$0xff]
          %v2305 = vld [vmem:[#allocation2 + $0x190] sm:$0xff]
          %v2306 = vld [vmem:[#allocation2 + $0x198] sm:$0xff]
          %v2307 = vld [vmem:[#allocation2 + $0x1a0] sm:$0xff]
          %v2308 = vld [vmem:[#allocation2 + $0x1a8] sm:$0xff]
          %v2309 = vld [vmem:[#allocation2 + $0x1b0] sm:$0xff]
          %v2310 = vld [vmem:[#allocation2 + $0x1b8] sm:$0xff]
          %v2311 = vld [vmem:[#allocation2 + $0x1c0] sm:$0xff]
          %v2312 = vld [vmem:[#allocation2 + $0x1c8] sm:$0xff]
          %v2313 = vld [vmem:[#allocation2 + $0x1d0] sm:$0xff]
          %v2314 = vld [vmem:[#allocation2 + $0x1d8] sm:$0xff]
          %v2315 = vld [vmem:[#allocation2 + $0x1e0] sm:$0xff]
          %v2316 = vld [vmem:[#allocation2 + $0x1e8] sm:$0xff]
          %v2317 = vld [vmem:[#allocation2 + $0x1f0] sm:$0xff]
          %v2318 = vld [vmem:[#allocation2 + $0x1f8] sm:$0xff]
          %v2319 = vld [vmem:[#allocation8] sm:$0xff]
          %v2320 = vld [vmem:[#allocation8 + $0x8] sm:$0xff]
          %v2321 = vld [vmem:[#allocation8 + $0x10] sm:$0xff]
          %v2322 = vld [vmem:[#allocation8 + $0x18] sm:$0xff]
          %v2323 = vld [vmem:[#allocation8 + $0x20] sm:$0xff]
          %v2324 = vld [vmem:[#allocation8 + $0x28] sm:$0xff]
          %v2325 = vld [vmem:[#allocation8 + $0x30] sm:$0xff]
          %v2326 = vld [vmem:[#allocation8 + $0x38] sm:$0xff]
          %v2327 = vld [vmem:[#allocation8 + $0x40] sm:$0xff]
          %v2328 = vld [vmem:[#allocation8 + $0x48] sm:$0xff]
          %v2329 = vld [vmem:[#allocation8 + $0x50] sm:$0xff]
          %v2330 = vld [vmem:[#allocation8 + $0x58] sm:$0xff]
          %v2331 = vld [vmem:[#allocation8 + $0x60] sm:$0xff]
          %v2332 = vld [vmem:[#allocation8 + $0x68] sm:$0xff]
          %v2333 = vld [vmem:[#allocation8 + $0x70] sm:$0xff]
          %v2334 = vld [vmem:[#allocation8 + $0x78] sm:$0xff]
          %v2335 = vld [vmem:[#allocation9] sm:$0x1]
          %v2337 = vperm.slane %v2335, 0
          %2339 = vmatpush.msra.mxu0 %v2334
          %2340 = vmatpush.msra.mxu0 %v2333
          %2341 = vmatpush.msra.mxu0 %v2332
          %2342 = vmatpush.msra.mxu0 %v2331
          %2343 = vmatpush.msra.mxu0 %v2330
          %2344 = vmatpush.msra.mxu0 %v2329
          %2345 = vmatpush.msra.mxu0 %v2328
          %2346 = vmatpush.msra.mxu0 %v2327
          %2347 = vmatpush.msra.mxu0 %v2326
          %2348 = vmatpush.msra.mxu0 %v2325
          %2349 = vmatpush.msra.mxu0 %v2324
          %2350 = vmatpush.msra.mxu0 %v2323
          %2351 = vmatpush.msra.mxu0 %v2322
          %2352 = vmatpush.msra.mxu0 %v2321
          %2353 = vmatpush.msra.mxu0 %v2320
          %2354 = vmatpush.msra.mxu0 %v2319
          %2355 = vmatmul.f32.gmra.mxu0 %v2255
          %v2356 = vpop.f32.mrf.mxu0
          %v2357 = vadd.f32 %v2337, %v2356
          %2358 = vmatmul.f32.gmra.mxu0 %v2256
          %v2359 = vpop.f32.mrf.mxu0
          %v2360 = vadd.f32 %v2337, %v2359
          %2361 = vmatmul.f32.gmra.mxu0 %v2257
          %v2362 = vpop.f32.mrf.mxu0
          %v2363 = vadd.f32 %v2337, %v2362
          %2364 = vmatmul.f32.gmra.mxu0 %v2258
          %v2365 = vpop.f32.mrf.mxu0
          %v2366 = vadd.f32 %v2337, %v2365
          %2367 = vmatmul.f32.gmra.mxu0 %v2259
          %v2368 = vpop.f32.mrf.mxu0
          %v2369 = vadd.f32 %v2337, %v2368
          %2370 = vmatmul.f32.gmra.mxu0 %v2260
          %v2371 = vpop.f32.mrf.mxu0
          %v2372 = vadd.f32 %v2337, %v2371
          %2373 = vmatmul.f32.gmra.mxu0 %v2261
          %v2374 = vpop.f32.mrf.mxu0
          %v2375 = vadd.f32 %v2337, %v2374
          %2376 = vmatmul.f32.gmra.mxu0 %v2262
          %v2377 = vpop.f32.mrf.mxu0
          %v2378 = vadd.f32 %v2337, %v2377
          %2379 = vmatmul.f32.gmra.mxu0 %v2263
          %v2380 = vpop.f32.mrf.mxu0
          %v2381 = vadd.f32 %v2337, %v2380
          %2382 = vmatmul.f32.gmra.mxu0 %v2264
          %v2383 = vpop.f32.mrf.mxu0
          %v2384 = vadd.f32 %v2337, %v2383
          %2385 = vmatmul.f32.gmra.mxu0 %v2265
          %v2386 = vpop.f32.mrf.mxu0
          %v2387 = vadd.f32 %v2337, %v2386
          %2388 = vmatmul.f32.gmra.mxu0 %v2266
          %v2389 = vpop.f32.mrf.mxu0
          %v2390 = vadd.f32 %v2337, %v2389
          %2391 = vmatmul.f32.gmra.mxu0 %v2267
          %v2392 = vpop.f32.mrf.mxu0
          %v2393 = vadd.f32 %v2337, %v2392
          %2394 = vmatmul.f32.gmra.mxu0 %v2268
          %v2395 = vpop.f32.mrf.mxu0
          %v2396 = vadd.f32 %v2337, %v2395
          %2397 = vmatmul.f32.gmra.mxu0 %v2269
          %v2398 = vpop.f32.mrf.mxu0
          %v2399 = vadd.f32 %v2337, %v2398
          %2400 = vmatmul.f32.gmra.mxu0 %v2270
          %v2401 = vpop.f32.mrf.mxu0
          %v2402 = vadd.f32 %v2337, %v2401
          %2403 = vmatmul.f32.gmra.mxu0 %v2271
          %v2404 = vpop.f32.mrf.mxu0
          %v2405 = vadd.f32 %v2337, %v2404
          %2406 = vmatmul.f32.gmra.mxu0 %v2272
          %v2407 = vpop.f32.mrf.mxu0
          %v2408 = vadd.f32 %v2337, %v2407
          %2409 = vmatmul.f32.gmra.mxu0 %v2273
          %v2410 = vpop.f32.mrf.mxu0
          %v2411 = vadd.f32 %v2337, %v2410
          %2412 = vmatmul.f32.gmra.mxu0 %v2274
          %v2413 = vpop.f32.mrf.mxu0
          %v2414 = vadd.f32 %v2337, %v2413
          %2415 = vmatmul.f32.gmra.mxu0 %v2275
          %v2416 = vpop.f32.mrf.mxu0
          %v2417 = vadd.f32 %v2337, %v2416
          %2418 = vmatmul.f32.gmra.mxu0 %v2276
          %v2419 = vpop.f32.mrf.mxu0
          %v2420 = vadd.f32 %v2337, %v2419
          %2421 = vmatmul.f32.gmra.mxu0 %v2277
          %v2422 = vpop.f32.mrf.mxu0
          %v2423 = vadd.f32 %v2337, %v2422
          %2424 = vmatmul.f32.gmra.mxu0 %v2278
          %v2425 = vpop.f32.mrf.mxu0
          %v2426 = vadd.f32 %v2337, %v2425
          %2427 = vmatmul.f32.gmra.mxu0 %v2279
          %v2428 = vpop.f32.mrf.mxu0
          %v2429 = vadd.f32 %v2337, %v2428
          %2430 = vmatmul.f32.gmra.mxu0 %v2280
          %v2431 = vpop.f32.mrf.mxu0
          %v2432 = vadd.f32 %v2337, %v2431
          %2433 = vmatmul.f32.gmra.mxu0 %v2281
          %v2434 = vpop.f32.mrf.mxu0
          %v2435 = vadd.f32 %v2337, %v2434
          %2436 = vmatmul.f32.gmra.mxu0 %v2282
          %v2437 = vpop.f32.mrf.mxu0
          %v2438 = vadd.f32 %v2337, %v2437
          %2439 = vmatmul.f32.gmra.mxu0 %v2283
          %v2440 = vpop.f32.mrf.mxu0
          %v2441 = vadd.f32 %v2337, %v2440
          %2442 = vmatmul.f32.gmra.mxu0 %v2284
          %v2443 = vpop.f32.mrf.mxu0
          %v2444 = vadd.f32 %v2337, %v2443
          %2445 = vmatmul.f32.gmra.mxu0 %v2285
          %v2446 = vpop.f32.mrf.mxu0
          %v2447 = vadd.f32 %v2337, %v2446
          %2448 = vmatmul.f32.gmra.mxu0 %v2286
          %v2449 = vpop.f32.mrf.mxu0
          %v2450 = vadd.f32 %v2337, %v2449
          %2451 = vmatmul.f32.gmra.mxu0 %v2287
          %v2452 = vpop.f32.mrf.mxu0
          %v2453 = vadd.f32 %v2337, %v2452
          %2454 = vmatmul.f32.gmra.mxu0 %v2288
          %v2455 = vpop.f32.mrf.mxu0
          %v2456 = vadd.f32 %v2337, %v2455
          %2457 = vmatmul.f32.gmra.mxu0 %v2289
          %v2458 = vpop.f32.mrf.mxu0
          %v2459 = vadd.f32 %v2337, %v2458
          %2460 = vmatmul.f32.gmra.mxu0 %v2290
          %v2461 = vpop.f32.mrf.mxu0
          %v2462 = vadd.f32 %v2337, %v2461
          %2463 = vmatmul.f32.gmra.mxu0 %v2291
          %v2464 = vpop.f32.mrf.mxu0
          %v2465 = vadd.f32 %v2337, %v2464
          %2466 = vmatmul.f32.gmra.mxu0 %v2292
          %v2467 = vpop.f32.mrf.mxu0
          %v2468 = vadd.f32 %v2337, %v2467
          %2469 = vmatmul.f32.gmra.mxu0 %v2293
          %v2470 = vpop.f32.mrf.mxu0
          %v2471 = vadd.f32 %v2337, %v2470
          %2472 = vmatmul.f32.gmra.mxu0 %v2294
          %v2473 = vpop.f32.mrf.mxu0
          %v2474 = vadd.f32 %v2337, %v2473
          %2475 = vmatmul.f32.gmra.mxu0 %v2295
          %v2476 = vpop.f32.mrf.mxu0
          %v2477 = vadd.f32 %v2337, %v2476
          %2478 = vmatmul.f32.gmra.mxu0 %v2296
          %v2479 = vpop.f32.mrf.mxu0
          %v2480 = vadd.f32 %v2337, %v2479
          %2481 = vmatmul.f32.gmra.mxu0 %v2297
          %v2482 = vpop.f32.mrf.mxu0
          %v2483 = vadd.f32 %v2337, %v2482
          %2484 = vmatmul.f32.gmra.mxu0 %v2298
          %v2485 = vpop.f32.mrf.mxu0
          %v2486 = vadd.f32 %v2337, %v2485
          %2487 = vmatmul.f32.gmra.mxu0 %v2299
          %v2488 = vpop.f32.mrf.mxu0
          %v2489 = vadd.f32 %v2337, %v2488
          %2490 = vmatmul.f32.gmra.mxu0 %v2300
          %v2491 = vpop.f32.mrf.mxu0
          %v2492 = vadd.f32 %v2337, %v2491
          %2493 = vmatmul.f32.gmra.mxu0 %v2301
          %v2494 = vpop.f32.mrf.mxu0
          %v2495 = vadd.f32 %v2337, %v2494
          %2496 = vmatmul.f32.gmra.mxu0 %v2302
          %v2497 = vpop.f32.mrf.mxu0
          %v2498 = vadd.f32 %v2337, %v2497
          %2499 = vmatmul.f32.gmra.mxu0 %v2303
          %v2500 = vpop.f32.mrf.mxu0
          %v2501 = vadd.f32 %v2337, %v2500
          %2502 = vmatmul.f32.gmra.mxu0 %v2304
          %v2503 = vpop.f32.mrf.mxu0
          %v2504 = vadd.f32 %v2337, %v2503
          %2505 = vmatmul.f32.gmra.mxu0 %v2305
          %v2506 = vpop.f32.mrf.mxu0
          %v2507 = vadd.f32 %v2337, %v2506
          %2508 = vmatmul.f32.gmra.mxu0 %v2306
          %v2509 = vpop.f32.mrf.mxu0
          %v2510 = vadd.f32 %v2337, %v2509
          %2511 = vmatmul.f32.gmra.mxu0 %v2307
          %v2512 = vpop.f32.mrf.mxu0
          %v2513 = vadd.f32 %v2337, %v2512
          %2514 = vmatmul.f32.gmra.mxu0 %v2308
          %v2515 = vpop.f32.mrf.mxu0
          %v2516 = vadd.f32 %v2337, %v2515
          %2517 = vmatmul.f32.gmra.mxu0 %v2309
          %v2518 = vpop.f32.mrf.mxu0
          %v2519 = vadd.f32 %v2337, %v2518
          %2520 = vmatmul.f32.gmra.mxu0 %v2310
          %v2521 = vpop.f32.mrf.mxu0
          %v2522 = vadd.f32 %v2337, %v2521
          %2523 = vmatmul.f32.gmra.mxu0 %v2311
          %v2524 = vpop.f32.mrf.mxu0
          %v2525 = vadd.f32 %v2337, %v2524
          %2526 = vmatmul.f32.gmra.mxu0 %v2312
          %v2527 = vpop.f32.mrf.mxu0
          %v2528 = vadd.f32 %v2337, %v2527
          %2529 = vmatmul.f32.gmra.mxu0 %v2313
          %v2530 = vpop.f32.mrf.mxu0
          %v2531 = vadd.f32 %v2337, %v2530
          %2532 = vmatmul.f32.gmra.mxu0 %v2314
          %v2533 = vpop.f32.mrf.mxu0
          %v2534 = vadd.f32 %v2337, %v2533
          %2535 = vmatmul.f32.gmra.mxu0 %v2315
          %v2536 = vpop.f32.mrf.mxu0
          %v2537 = vadd.f32 %v2337, %v2536
          %2538 = vmatmul.f32.gmra.mxu0 %v2316
          %v2539 = vpop.f32.mrf.mxu0
          %v2540 = vadd.f32 %v2337, %v2539
          %2541 = vmatmul.f32.gmra.mxu0 %v2317
          %v2542 = vpop.f32.mrf.mxu0
          %v2543 = vadd.f32 %v2337, %v2542
          %2544 = vmatmul.f32.gmra.mxu0 %v2318
          %v2545 = vpop.f32.mrf.mxu0
          %v2546 = vadd.f32 %v2337, %v2545
          %2547 = vdwg.mxu0
          %v2548 = vmax.f32 %v2357, 0.0
          %v2549 = vmax.f32 %v2360, 0.0
          %v2550 = vmax.f32 %v2363, 0.0
          %v2551 = vmax.f32 %v2366, 0.0
          %v2552 = vmax.f32 %v2369, 0.0
          %v2553 = vmax.f32 %v2372, 0.0
          %v2554 = vmax.f32 %v2375, 0.0
          %v2555 = vmax.f32 %v2378, 0.0
          %v2556 = vmax.f32 %v2381, 0.0
          %v2557 = vmax.f32 %v2384, 0.0
          %v2558 = vmax.f32 %v2387, 0.0
          %v2559 = vmax.f32 %v2390, 0.0
          %v2560 = vmax.f32 %v2393, 0.0
          %v2561 = vmax.f32 %v2396, 0.0
          %v2562 = vmax.f32 %v2399, 0.0
          %v2563 = vmax.f32 %v2402, 0.0
          %v2564 = vmax.f32 %v2405, 0.0
          %v2565 = vmax.f32 %v2408, 0.0
          %v2566 = vmax.f32 %v2411, 0.0
          %v2567 = vmax.f32 %v2414, 0.0
          %v2568 = vmax.f32 %v2417, 0.0
          %v2569 = vmax.f32 %v2420, 0.0
          %v2570 = vmax.f32 %v2423, 0.0
          %v2571 = vmax.f32 %v2426, 0.0
          %v2572 = vmax.f32 %v2429, 0.0
          %v2573 = vmax.f32 %v2432, 0.0
          %v2574 = vmax.f32 %v2435, 0.0
          %v2575 = vmax.f32 %v2438, 0.0
          %v2576 = vmax.f32 %v2441, 0.0
          %v2577 = vmax.f32 %v2444, 0.0
          %v2578 = vmax.f32 %v2447, 0.0
          %v2579 = vmax.f32 %v2450, 0.0
          %v2580 = vmax.f32 %v2453, 0.0
          %v2581 = vmax.f32 %v2456, 0.0
          %v2582 = vmax.f32 %v2459, 0.0
          %v2583 = vmax.f32 %v2462, 0.0
          %v2584 = vmax.f32 %v2465, 0.0
          %v2585 = vmax.f32 %v2468, 0.0
          %v2586 = vmax.f32 %v2471, 0.0
          %v2587 = vmax.f32 %v2474, 0.0
          %v2588 = vmax.f32 %v2477, 0.0
          %v2589 = vmax.f32 %v2480, 0.0
          %v2590 = vmax.f32 %v2483, 0.0
          %v2591 = vmax.f32 %v2486, 0.0
          %v2592 = vmax.f32 %v2489, 0.0
          %v2593 = vmax.f32 %v2492, 0.0
          %v2594 = vmax.f32 %v2495, 0.0
          %v2595 = vmax.f32 %v2498, 0.0
          %v2596 = vmax.f32 %v2501, 0.0
          %v2597 = vmax.f32 %v2504, 0.0
          %v2598 = vmax.f32 %v2507, 0.0
          %v2599 = vmax.f32 %v2510, 0.0
          %v2600 = vmax.f32 %v2513, 0.0
          %v2601 = vmax.f32 %v2516, 0.0
          %v2602 = vmax.f32 %v2519, 0.0
          %v2603 = vmax.f32 %v2522, 0.0
          %v2604 = vmax.f32 %v2525, 0.0
          %v2605 = vmax.f32 %v2528, 0.0
          %v2606 = vmax.f32 %v2531, 0.0
          %v2607 = vmax.f32 %v2534, 0.0
          %v2608 = vmax.f32 %v2537, 0.0
          %v2609 = vmax.f32 %v2540, 0.0
          %v2610 = vmax.f32 %v2543, 0.0
          %v2611 = vmax.f32 %v2546, 0.0
          %v2612 = vpack.c.bf16 %v2548, %v2548
          %v2613 = vpack.c.bf16 %v2549, %v2549
          %v2614 = vpack.c.bf16 %v2550, %v2550
          %v2615 = vpack.c.bf16 %v2551, %v2551
          %v2616 = vpack.c.bf16 %v2552, %v2552
          %v2617 = vpack.c.bf16 %v2553, %v2553
          %v2618 = vpack.c.bf16 %v2554, %v2554
          %v2619 = vpack.c.bf16 %v2555, %v2555
          %v2620 = vpack.c.bf16 %v2556, %v2556
          %v2621 = vpack.c.bf16 %v2557, %v2557
          %v2622 = vpack.c.bf16 %v2558, %v2558
          %v2623 = vpack.c.bf16 %v2559, %v2559
          %v2624 = vpack.c.bf16 %v2560, %v2560
          %v2625 = vpack.c.bf16 %v2561, %v2561
          %v2626 = vpack.c.bf16 %v2562, %v2562
          %v2627 = vpack.c.bf16 %v2563, %v2563
          %v2628 = vpack.c.bf16 %v2564, %v2564
          %v2629 = vpack.c.bf16 %v2565, %v2565
          %v2630 = vpack.c.bf16 %v2566, %v2566
          %v2631 = vpack.c.bf16 %v2567, %v2567
          %v2632 = vpack.c.bf16 %v2568, %v2568
          %v2633 = vpack.c.bf16 %v2569, %v2569
          %v2634 = vpack.c.bf16 %v2570, %v2570
          %v2635 = vpack.c.bf16 %v2571, %v2571
          %v2636 = vpack.c.bf16 %v2572, %v2572
          %v2637 = vpack.c.bf16 %v2573, %v2573
          %v2638 = vpack.c.bf16 %v2574, %v2574
          %v2639 = vpack.c.bf16 %v2575, %v2575
          %v2640 = vpack.c.bf16 %v2576, %v2576
          %v2641 = vpack.c.bf16 %v2577, %v2577
          %v2642 = vpack.c.bf16 %v2578, %v2578
          %v2643 = vpack.c.bf16 %v2579, %v2579
          %v2644 = vpack.c.bf16 %v2580, %v2580
          %v2645 = vpack.c.bf16 %v2581, %v2581
          %v2646 = vpack.c.bf16 %v2582, %v2582
          %v2647 = vpack.c.bf16 %v2583, %v2583
          %v2648 = vpack.c.bf16 %v2584, %v2584
          %v2649 = vpack.c.bf16 %v2585, %v2585
          %v2650 = vpack.c.bf16 %v2586, %v2586
          %v2651 = vpack.c.bf16 %v2587, %v2587
          %v2652 = vpack.c.bf16 %v2588, %v2588
          %v2653 = vpack.c.bf16 %v2589, %v2589
          %v2654 = vpack.c.bf16 %v2590, %v2590
          %v2655 = vpack.c.bf16 %v2591, %v2591
          %v2656 = vpack.c.bf16 %v2592, %v2592
          %v2657 = vpack.c.bf16 %v2593, %v2593
          %v2658 = vpack.c.bf16 %v2594, %v2594
          %v2659 = vpack.c.bf16 %v2595, %v2595
          %v2660 = vpack.c.bf16 %v2596, %v2596
          %v2661 = vpack.c.bf16 %v2597, %v2597
          %v2662 = vpack.c.bf16 %v2598, %v2598
          %v2663 = vpack.c.bf16 %v2599, %v2599
          %v2664 = vpack.c.bf16 %v2600, %v2600
          %v2665 = vpack.c.bf16 %v2601, %v2601
          %v2666 = vpack.c.bf16 %v2602, %v2602
          %v2667 = vpack.c.bf16 %v2603, %v2603
          %v2668 = vpack.c.bf16 %v2604, %v2604
          %v2669 = vpack.c.bf16 %v2605, %v2605
          %v2670 = vpack.c.bf16 %v2606, %v2606
          %v2671 = vpack.c.bf16 %v2607, %v2607
          %v2672 = vpack.c.bf16 %v2608, %v2608
          %v2673 = vpack.c.bf16 %v2609, %v2609
          %v2674 = vpack.c.bf16 %v2610, %v2610
          %v2675 = vpack.c.bf16 %v2611, %v2611
          %2676 = vst [vmem:[%s282] sm:$0xf] %v2612
          %2677 = vst [vmem:[%s282 + $0x4] sm:$0xf] %v2613
          %2678 = vst [vmem:[%s282 + $0x8] sm:$0xf] %v2614
          %2679 = vst [vmem:[%s282 + $0xc] sm:$0xf] %v2615
          %2680 = vst [vmem:[%s282 + $0x10] sm:$0xf] %v2616
          %2681 = vst [vmem:[%s282 + $0x14] sm:$0xf] %v2617
          %2682 = vst [vmem:[%s282 + $0x18] sm:$0xf] %v2618
          %2683 = vst [vmem:[%s282 + $0x1c] sm:$0xf] %v2619
          %2684 = vst [vmem:[%s282 + $0x20] sm:$0xf] %v2620
          %2685 = vst [vmem:[%s282 + $0x24] sm:$0xf] %v2621
          %2686 = vst [vmem:[%s282 + $0x28] sm:$0xf] %v2622
          %2687 = vst [vmem:[%s282 + $0x2c] sm:$0xf] %v2623
          %2688 = vst [vmem:[%s282 + $0x30] sm:$0xf] %v2624
          %2689 = vst [vmem:[%s282 + $0x34] sm:$0xf] %v2625
          %2690 = vst [vmem:[%s282 + $0x38] sm:$0xf] %v2626
          %2691 = vst [vmem:[%s282 + $0x3c] sm:$0xf] %v2627
          %2692 = vst [vmem:[%s282 + $0x40] sm:$0xf] %v2628
          %2693 = vst [vmem:[%s282 + $0x44] sm:$0xf] %v2629
          %2694 = vst [vmem:[%s282 + $0x48] sm:$0xf] %v2630
          %2695 = vst [vmem:[%s282 + $0x4c] sm:$0xf] %v2631
          %2696 = vst [vmem:[%s282 + $0x50] sm:$0xf] %v2632
          %2697 = vst [vmem:[%s282 + $0x54] sm:$0xf] %v2633
          %2698 = vst [vmem:[%s282 + $0x58] sm:$0xf] %v2634
          %2699 = vst [vmem:[%s282 + $0x5c] sm:$0xf] %v2635
          %2700 = vst [vmem:[%s282 + $0x60] sm:$0xf] %v2636
          %2701 = vst [vmem:[%s282 + $0x64] sm:$0xf] %v2637
          %2702 = vst [vmem:[%s282 + $0x68] sm:$0xf] %v2638
          %2703 = vst [vmem:[%s282 + $0x6c] sm:$0xf] %v2639
          %2704 = vst [vmem:[%s282 + $0x70] sm:$0xf] %v2640
          %2705 = vst [vmem:[%s282 + $0x74] sm:$0xf] %v2641
          %2706 = vst [vmem:[%s282 + $0x78] sm:$0xf] %v2642
          %2707 = vst [vmem:[%s282 + $0x7c] sm:$0xf] %v2643
          %2708 = vst [vmem:[%s282 + $0x80] sm:$0xf] %v2644
          %2709 = vst [vmem:[%s282 + $0x84] sm:$0xf] %v2645
          %2710 = vst [vmem:[%s282 + $0x88] sm:$0xf] %v2646
          %2711 = vst [vmem:[%s282 + $0x8c] sm:$0xf] %v2647
          %2712 = vst [vmem:[%s282 + $0x90] sm:$0xf] %v2648
          %2713 = vst [vmem:[%s282 + $0x94] sm:$0xf] %v2649
          %2714 = vst [vmem:[%s282 + $0x98] sm:$0xf] %v2650
          %2715 = vst [vmem:[%s282 + $0x9c] sm:$0xf] %v2651
          %2716 = vst [vmem:[%s282 + $0xa0] sm:$0xf] %v2652
          %2717 = vst [vmem:[%s282 + $0xa4] sm:$0xf] %v2653
          %2718 = vst [vmem:[%s282 + $0xa8] sm:$0xf] %v2654
          %2719 = vst [vmem:[%s282 + $0xac] sm:$0xf] %v2655
          %2720 = vst [vmem:[%s282 + $0xb0] sm:$0xf] %v2656
          %2721 = vst [vmem:[%s282 + $0xb4] sm:$0xf] %v2657
          %2722 = vst [vmem:[%s282 + $0xb8] sm:$0xf] %v2658
          %2723 = vst [vmem:[%s282 + $0xbc] sm:$0xf] %v2659
          %2724 = vst [vmem:[%s282 + $0xc0] sm:$0xf] %v2660
          %2725 = vst [vmem:[%s282 + $0xc4] sm:$0xf] %v2661
          %2726 = vst [vmem:[%s282 + $0xc8] sm:$0xf] %v2662
          %2727 = vst [vmem:[%s282 + $0xcc] sm:$0xf] %v2663
          %2728 = vst [vmem:[%s282 + $0xd0] sm:$0xf] %v2664
          %2729 = vst [vmem:[%s282 + $0xd4] sm:$0xf] %v2665
          %2730 = vst [vmem:[%s282 + $0xd8] sm:$0xf] %v2666
          %2731 = vst [vmem:[%s282 + $0xdc] sm:$0xf] %v2667
          %2732 = vst [vmem:[%s282 + $0xe0] sm:$0xf] %v2668
          %2733 = vst [vmem:[%s282 + $0xe4] sm:$0xf] %v2669
          %2734 = vst [vmem:[%s282 + $0xe8] sm:$0xf] %v2670
          %2735 = vst [vmem:[%s282 + $0xec] sm:$0xf] %v2671
          %2736 = vst [vmem:[%s282 + $0xf0] sm:$0xf] %v2672
          %2737 = vst [vmem:[%s282 + $0xf4] sm:$0xf] %v2673
          %2738 = vst [vmem:[%s282 + $0xf8] sm:$0xf] %v2674
          %2739 = vst [vmem:[%s282 + $0xfc] sm:$0xf] %v2675
        $region60: #{tpu_custom_call.1} parent=35 // pred_fallthru
          _
        %s2740 = sand.u32 %s134, 1
        %s2741 = scalar_lea.sflag [#allocation5], %s2740
        %s2742 = sand.u32 %s134, 1
        %s2743 = smul.addr %s2742, 256
        %s2744 = scalar_lea.vmem [#allocation11], %s2743
        // Predicated region
        $region61: #{tpu_custom_call.1} parent=35 // pred_check
          %p2745 = pneg %p144
        $region62: #{tpu_custom_call.1} parent=35 // pred_check_branch
          %2747 = sbr.rel (%p2745) target = $region64
        $region63: #{tpu_custom_call.1} parent=35 // pred_region
          %s2748 = smul.u32 64, %s27
          %2750 = vsyncadd %s2741, 0
          %s2751 = smul.addr %s2748, 4
          %s2752 = scalar_lea.hbm %s4, %s2751
          %s2753 = sshll.u32 %s2744, 4
          %s2754 = int_to_ptr.vmem [resolvable:$true] %s2753
          %s2755 = sshll.u32 %s2752, 4
          %s2756 = int_to_ptr.hbm [resolvable:$true] %s2755
          %2761 = dma.vmem_to_hbm [thread:$0]  %s2754, 4096, %s2756, %s2741, 64, 64, 4
        $region64: #{tpu_custom_call.1} parent=35 // pred_fallthru
          _
      $region36: #{tpu_custom_call.1} parent=5 // pred_fallthru
        _
      %p2762 = scmp.le.s32.totalorder 2, %s18
      // Predicated region
      $region65: #{tpu_custom_call.1} parent=5 // pred_check
        %p2763 = pneg %p2762
      $region66: #{tpu_custom_call.1} parent=5 // pred_check_branch
        %2765 = sbr.rel (%p2763) target = $region68
      $region67: #{tpu_custom_call.1} parent=5 // pred_region
        %s2766 = ssub.s32 %s18, 2
        // Predicated region
        $region69: #{tpu_custom_call.1} parent=67 // pred_check
          %p2767 = pneg %p150
        $region70: #{tpu_custom_call.1} parent=67 // pred_check_branch
          %2769 = sbr.rel (%p2767) target = $region72
        $region71: #{tpu_custom_call.1} parent=67 // pred_region
          %s2770 = sand.u32 %s135, 1
          %s2771 = scalar_lea.sflag [#allocation5], %s2770
          %s2772 = sand.u32 %s135, 1
          %s2773 = smul.addr %s2772, 256
          %s2774 = scalar_lea.vmem [#allocation11], %s2773
          %2776 = dma.done %s2771, 4096
        $region72: #{tpu_custom_call.1} parent=67 // pred_fallthru
          _
      $region68: #{tpu_custom_call.1} parent=5 // pred_fallthru
        _
    $region6: #{tpu_custom_call.1} parent=1 // loop_footer
      %s22 = sadd.s32 1, %s18
    $region7: #{tpu_custom_call.1} parent=1 // loop_footer_branch
      %17 = sbr.rel target = $region3
    $region8: #{tpu_custom_call.1} parent=1 // loop_exit
      _
    %2777 = vsyncpa [#allocation4], 1
    %s2778 = scalar_lea.sflag [#allocation4], 1
    %2779 = vsyncpa %s2778, 1
    %2780 = vsyncpa [#allocation7], 1
    %2781 = vsyncpa [#allocation10], 1
    %2782 = vsyncpa [#allocation5], 1
    %s2783 = scalar_lea.sflag [#allocation5], 1
    %2784 = vsyncpa %s2783, 1

</llo_original>
